<compile_context>
chip_gen: v6e
topology: v6e:2x2x1
jax: 0.10.0
libtpu: 0.0.40
codegen_flags: <defaults>
</compile_context>

<pallas_src>
import jax
import jax.numpy as jnp
from jax import lax
from jax.experimental import pallas as pl
from jax.experimental.pallas import tpu as pltpu

LANE = 128                    # vreg lane width
MXU_DTYPE = jnp.bfloat16      # matmul operand dtype (f32 accumulation everywhere)
STREAM_DTYPE = jnp.bfloat16   # dtype of gi / inter-layer activations in HBM
# Set both policies to jnp.float32 to recover exact PyTorch f32 numerics.


# ----------------------------- HW-aware sizing ------------------------------ #

def _round_up(x, m):
    return ((x + m - 1) // m) * m


def _tpu_vmem_capacity_bytes():
    try:
        return int(pltpu.get_tpu_info().vmem_capacity_bytes)
    except Exception:
        return 128 * 1024 * 1024   # conservative default (v5e/v6e class)


def _vmem_limit_bytes():
    cap = _tpu_vmem_capacity_bytes()
    if cap >= 128 * 1024 * 1024:   # v5e / v6e: raise well above the 32 MiB default
        return 96 * 1024 * 1024
    return 48 * 1024 * 1024        # v7x class (64 MiB per TensorCore): headroom


def _tile_budget_bytes():
    # Leave ~20% slack for compiler-internal scratch and under-counted buffers.
    return int(_vmem_limit_bytes() * 0.8)


def _num_tensorcores():
    # Heuristic: 64 MiB-per-core VMEM chips (v7x class) have 2 TensorCores per
    # chip; the 128 MiB chips (v5e/v6e) targeted here have 1.
    return 2 if _tpu_vmem_capacity_bytes() <= 64 * 1024 * 1024 else 1


# ----------------------------- Linear (tiled) ------------------------------- #

def _linear_kernel(x_ref, w_ref, b_ref, o_ref):
    acc = jnp.dot(x_ref[...].astype(MXU_DTYPE), w_ref[...].astype(MXU_DTYPE),
                  preferred_element_type=jnp.float32)
    o_ref[...] = (acc + b_ref[...]).astype(o_ref.dtype)


def _pick_lane_block(O, cap=512):
    """Largest 128-multiple divisor of O that is <= cap (O is pre-padded)."""
    if O % LANE != 0:
        return O                                   # fallback: full (== array dim)
    for c in range(min(cap, O), LANE - 1, -LANE):
        if O % c == 0:
            return c
    return LANE


def _pick_row_block(M, K, bn, x_bytes, w_bytes, out_bytes):
    budget = _tile_budget_bytes()
    fixed = 2 * K * bn * w_bytes + 2 * bn * 4           # weight + bias (2-buffered)
    per_row = 2 * K * x_bytes + 2 * bn * out_bytes      # x + out blocks (2-buffered)
    max_bm = max(8, (budget - fixed) // per_row)
    bm = min(_round_up(M, 8), (max_bm // 8) * 8, 2048)
    return max(8, int(bm))


def linear_tiled(x2d, w_t, b, out_dtype=jnp.float32):
    """y = x2d @ w_t + b, tiled over rows (M) and output columns (N)."""
    M, K = x2d.shape
    O = w_t.shape[1]
    bn = _pick_lane_block(O)
    bm = _pick_row_block(M, K, bn,
                         x2d.dtype.itemsize,
                         jnp.dtype(MXU_DTYPE).itemsize,
                         jnp.dtype(out_dtype).itemsize)
    Mp = _round_up(M, bm)
    if Mp != M:                       # ragged rows: pad instead of one giant block
        x2d = jnp.pad(x2d, ((0, Mp - M), (0, 0)))

    y = pl.pallas_call(
        _linear_kernel,
        out_shape=jax.ShapeDtypeStruct((Mp, O), out_dtype),
        grid_spec=pltpu.PrefetchScalarGridSpec(
            num_scalar_prefetch=0,
            grid=(Mp // bm, O // bn),
            in_specs=[pl.BlockSpec((bm, K), lambda i, j: (i, 0)),
                      pl.BlockSpec((K, bn), lambda i, j: (0, j)),
                      pl.BlockSpec((1, bn), lambda i, j: (0, j))],
            out_specs=pl.BlockSpec((bm, bn), lambda i, j: (i, j))),
        compiler_params=pltpu.CompilerParams(
            dimension_semantics=("parallel", "parallel"),
            vmem_limit_bytes=_vmem_limit_bytes()),
    )(x2d, w_t.astype(MXU_DTYPE), b)
    return y[:M] if Mp != M else y


# ----------------------------- GRU recurrence ------------------------------- #

def _pick_batch_block(B):
    # Split the batch across TensorCores only on multi-TC chips; on single-TC
    # chips the grid is a serial loop and splitting costs MXU occupancy + steps.
    if _num_tensorcores() >= 2 and B % 16 == 0:
        return B // 2
    return B


def _pick_time_chunk(T, BB, Hp, gi_bytes, y_bytes, whh_bytes):
    budget = _tile_budget_bytes()
    fixed = (2 * Hp * 3 * Hp * whh_bytes   # W_hh blocks (default double-buffered)
             + 2 * BB * Hp * 4             # h0 blocks
             + 2 * Hp * 4                  # b_hn blocks
             + 2 * BB * Hp * 4             # hT output blocks
             + BB * Hp * 4)                # h scratch
    per_t = 2 * BB * 3 * Hp * gi_bytes + 2 * BB * Hp * y_bytes
    max_tc = int(max(1, min((budget - fixed) // per_t, T, 512)))
    for c in range(max_tc, 0, -1):         # largest divisor of T <= max_tc
        if T % c == 0:
            return c
    return 1


def gru_layer(gi_all, h0, w_hh_t, b_hn):
    """Recurrent part of one GRU layer (padded, 128-lane gate layout).

    gi_all: (T, B, 3Hp) time-major x-side gate pre-activations (STREAM_DTYPE);
            b_ih folded in for all gates, b_hh folded in for r,z gates.
    h0:     (B, Hp) f32 initial hidden state (padded columns are zero).
    w_hh_t: (Hp, 3Hp) hidden->gates weights (transposed), gate order [r,z,n].
    b_hn:   (1, Hp) f32 hidden bias of the n gate (kept separate, PyTorch GRU).
    Returns y (T, B, Hp) STREAM_DTYPE and hT (B, Hp) f32.
    """
    T, B, G = gi_all.shape
    Hp = h0.shape[1]
    BB = _pick_batch_block(B)
    nB = B // BB
    TC = _pick_time_chunk(T, BB, Hp,
                          gi_all.dtype.itemsize,
                          jnp.dtype(STREAM_DTYPE).itemsize,
                          jnp.dtype(MXU_DTYPE).itemsize)
    nT = T // TC
    unroll = True if TC <= 8 else 4

    def kernel(gi_ref, h0_ref, whh_ref, bhn_ref, y_ref, hT_ref, h_scratch):
        t_idx = pl.program_id(1)

        @pl.when(t_idx == 0)
        def _():
            h_scratch[...] = h0_ref[...]

        # Loop invariants hoisted out of the serial time loop (incl. broadcast).
        whh = whh_ref[...]
        bhn = jnp.broadcast_to(bhn_ref[...], (BB, Hp))

        def step(t, h_prev):
            gi = gi_ref[t].astype(jnp.float32)                  # (BB, 3Hp)
            gh = jnp.dot(h_prev.astype(MXU_DTYPE), whh,
                         preferred_element_type=jnp.float32)    # (BB, 3Hp)
            # Gate slabs are Hp-wide (multiple of 128) -> clean vreg partitions.
            r = jax.nn.sigmoid(gi[:, 0:Hp] + gh[:, 0:Hp])
            z = jax.nn.sigmoid(gi[:, Hp:2 * Hp] + gh[:, Hp:2 * Hp])
            n = jnp.tanh(gi[:, 2 * Hp:] + r * (gh[:, 2 * Hp:] + bhn))
            h_new = (1.0 - z) * n + z * h_prev
            y_ref[t] = h_new.astype(y_ref.dtype)
            return h_new                                        # register carry

        h_last = lax.fori_loop(0, TC, step, h_scratch[...], unroll=unroll)
        h_scratch[...] = h_last

        @pl.when(t_idx == pl.num_programs(1) - 1)
        def _():
            hT_ref[...] = h_last

    y, hT = pl.pallas_call(
        kernel,
        out_shape=(jax.ShapeDtypeStruct((T, B, Hp), STREAM_DTYPE),
                   jax.ShapeDtypeStruct((B, Hp), jnp.float32)),
        grid_spec=pltpu.PrefetchScalarGridSpec(
            num_scalar_prefetch=0,
            grid=(nB, nT),
            in_specs=[
                pl.BlockSpec((TC, BB, G), lambda b, t: (t, b, 0)),   # gi chunk
                pl.BlockSpec((BB, Hp), lambda b, t: (b, 0)),          # h0
                # TODO(synk): single-buffer these constant-index inputs
                # (pipeline_mode=pl.Buffered(1)); the VMEM budget above accounts
                # for default double-buffering in the meantime.
                pl.BlockSpec((Hp, G), lambda b, t: (0, 0)),           # W_hh
                pl.BlockSpec((1, Hp), lambda b, t: (0, 0)),           # b_hn
            ],
            out_specs=(
                pl.BlockSpec((TC, BB, Hp), lambda b, t: (t, b, 0)),   # y chunk
                pl.BlockSpec((BB, Hp), lambda b, t: (b, 0)),          # hT (resident)
            ),
            scratch_shapes=[pltpu.VMEM((BB, Hp), jnp.float32)],
        ),
        compiler_params=pltpu.CompilerParams(
            dimension_semantics=("parallel", "arbitrary"),
            vmem_limit_bytes=_vmem_limit_bytes(),
        ),
    )(gi_all, h0, w_hh_t.astype(MXU_DTYPE), b_hn)
    return y, hT


# ------------------------------- Forward ------------------------------------ #

def _pad_gate_mat(w, H, Hp, rows_to):
    """(R, 3H) -> (rows_to, 3Hp), zero-padded per gate slab [r|z|n]."""
    R = w.shape[0]
    parts = [jnp.pad(w[:, g * H:(g + 1) * H],
                     ((0, rows_to - R), (0, Hp - H))) for g in range(3)]
    return jnp.concatenate(parts, axis=1)


def _pad_gate_vec(b, H, Hp):
    parts = [jnp.pad(b[:, g * H:(g + 1) * H], ((0, 0), (0, Hp - H)))
             for g in range(3)]
    return jnp.concatenate(parts, axis=1)


def creation_rnn_forward(params, x, hid):
    """x: (B, T, Din) batch_first, hid: (L, B, H) -> (out (B,T,O), hid (L,B,H))."""
    B, T, _ = x.shape
    L, _, H = hid.shape
    Hp = _round_up(H, LANE)

    layer_in = jnp.transpose(x, (1, 0, 2))            # (T, B, Din) time-major
    hid_p = jnp.pad(hid, ((0, 0), (0, 0), (0, Hp - H))) if Hp != H else hid

    hT_list = []
    for l, p in enumerate(params["gru"]):
        d_in = layer_in.shape[-1]                     # Din (l=0) or Hp (l>0)
        # Pad gate slabs to 128-lane multiples (zeros keep padded h columns 0).
        b_ih = _pad_gate_vec(p["b_ih"], H, Hp)
        b_hh = _pad_gate_vec(p["b_hh"], H, Hp)
        # r,z: both biases fold into the x-side; n keeps b_hn separate (PyTorch GRU).
        b_comb = jnp.concatenate(
            [b_ih[:, 0:Hp] + b_hh[:, 0:Hp],
             b_ih[:, Hp:2 * Hp] + b_hh[:, Hp:2 * Hp],
             b_ih[:, 2 * Hp:]], axis=1)               # (1, 3Hp)
        b_hn = b_hh[:, 2 * Hp:]                       # (1, Hp)
        w_ih_t = _pad_gate_mat(p["w_ih_t"], H, Hp, rows_to=d_in)
        w_hh_t = _pad_gate_mat(p["w_hh_t"], H, Hp, rows_to=Hp)

        # One big MXU GEMM for the x-side of every timestep; gi streamed as bf16.
        gi = linear_tiled(layer_in.reshape(T * B, d_in), w_ih_t, b_comb,
                          out_dtype=STREAM_DTYPE)
        gi = gi.reshape(T, B, 3 * Hp)

        y, hT = gru_layer(gi, hid_p[l], w_hh_t, b_hn)
        layer_in = y
        hT_list.append(hT[:, :H])

    hid_out = jnp.stack(hT_list, axis=0)              # (L, B, H)

    # Lane-dense output head: pad O to a 128 multiple, run row-wise on the
    # time-major activations, transpose only the small (T,B,Op) result, slice.
    w_o, b_o = params["o2o"]["w_t"], params["o2o"]["b"]
    O = w_o.shape[1]
    Op = _round_up(O, LANE)
    w_o = jnp.pad(w_o, ((0, Hp - H), (0, Op - O)))
    b_o = jnp.pad(b_o, ((0, 0), (0, Op - O)))
    out2d = linear_tiled(layer_in.reshape(T * B, Hp), w_o, b_o,
                         out_dtype=jnp.float32)
    out = jnp.transpose(out2d.reshape(T, B, Op), (1, 0, 2))[:, :, :O]
    return out, hid_out


# --------------------------- Parameter creation ----------------------------- #

def init_params(key, input_dim, hidden_dim, num_layers, output_dim):
    params = {"gru": [], "o2o": {}}
    k = 1.0 / jnp.sqrt(hidden_dim)
    for l in range(num_layers):
        d_in = input_dim if l == 0 else hidden_dim
        key, k1, k2, k3, k4 = jax.random.split(key, 5)
        params["gru"].append({
            # stored transposed: (Din, 3H), (H, 3H); gate order [r, z, n]
            "w_ih_t": jax.random.uniform(k1, (d_in, 3 * hidden_dim),
                                         jnp.float32, -k, k),
            "w_hh_t": jax.random.uniform(k2, (hidden_dim, 3 * hidden_dim),
                                         jnp.float32, -k, k),
            "b_ih": jax.random.uniform(k3, (1, 3 * hidden_dim),
                                       jnp.float32, -k, k),
            "b_hh": jax.random.uniform(k4, (1, 3 * hidden_dim),
                                       jnp.float32, -k, k),
        })
    kl = 1.0 / jnp.sqrt(hidden_dim)
    key, k1, k2 = jax.random.split(key, 3)
    params["o2o"]["w_t"] = jax.random.uniform(
        k1, (hidden_dim, output_dim), jnp.float32, -kl, kl)
    params["o2o"]["b"] = jax.random.uniform(
        k2, (1, output_dim), jnp.float32, -kl, kl)
    return params


# --------------------------- Pure-JAX reference ----------------------------- #

def reference_forward(params, x, hid):
    """Reference mirroring the kernels' precision policy (MXU operands in
    MXU_DTYPE, gi / inter-layer activations rounded to STREAM_DTYPE, f32
    accumulation + f32 gate math).  With both policy dtypes set to float32
    this is exactly the PyTorch f32 GRU + Linear math."""
    B, T, _ = x.shape
    H = hid.shape[-1]

    def mm(a, w):
        return jnp.dot(a.astype(MXU_DTYPE), w.astype(MXU_DTYPE),
                       preferred_element_type=jnp.float32)

    layer_in = x
    hTs = []
    for l, p in enumerate(params["gru"]):
        wih, whh = p["w_ih_t"], p["w_hh_t"]
        bih, bhh = p["b_ih"][0], p["b_hh"][0]
        b_comb = jnp.concatenate([bih[:H] + bhh[:H],
                                  bih[H:2 * H] + bhh[H:2 * H],
                                  bih[2 * H:]])
        b_hn = bhh[2 * H:]

        x_tm = jnp.transpose(layer_in, (1, 0, 2)).reshape(T * B, -1)
        gi_all = (mm(x_tm, wih) + b_comb).astype(STREAM_DTYPE)
        gi_all = gi_all.astype(jnp.float32).reshape(T, B, 3 * H)

        def step(h, gi):
            gh = mm(h, whh)
            r = jax.nn.sigmoid(gi[:, :H] + gh[:, :H])
            z = jax.nn.sigmoid(gi[:, H:2 * H] + gh[:, H:2 * H])
            n = jnp.tanh(gi[:, 2 * H:] + r * (gh[:, 2 * H:] + b_hn))
            h_new = (1.0 - z) * n + z * h
            return h_new, h_new.astype(STREAM_DTYPE).astype(jnp.float32)

        hT, ys = lax.scan(step, hid[l], gi_all)
        layer_in = jnp.transpose(ys, (1, 0, 2))
        hTs.append(hT)

    out2d = mm(layer_in.reshape(B * T, H), params["o2o"]["w_t"]) + params["o2o"]["b"][0]
    out = out2d.reshape(B, T, -1)
    return out, jnp.stack(hTs, axis=0)


# ----------------------------------- Main ----------------------------------- #

if __name__ == "__main__":
    # Small shapes consistent with the module's forward.
    nbatch, seq, input_dim = 2, 8, 4
    hidden_dim, num_layers, output_dim = 32, 2, 4

    params = init_params(jax.random.PRNGKey(42),
                         input_dim, hidden_dim, num_layers, output_dim)

    key = jax.random.PRNGKey(0)
    x = jax.random.normal(key, (nbatch, seq, input_dim), jnp.float32)
    hid = jnp.zeros((num_layers, nbatch, hidden_dim), jnp.float32)  # init_hidden()

    fwd = jax.jit(creation_rnn_forward)
    out, hid_out = fwd(params, x, hid)
    out = jax.block_until_ready(out)
    hid_out = jax.block_until_ready(hid_out)

    # Sanity check against a pure-JAX reference of the same math / same
    # precision policy (tight 1e-5 when MXU_DTYPE/STREAM_DTYPE are float32).
    ref_out, ref_hid = reference_forward(params, x, hid)
    assert out.shape == (nbatch, seq, output_dim)
    assert hid_out.shape == (num_layers, nbatch, hidden_dim)
    tol = 1e-5 if jnp.dtype(MXU_DTYPE) == jnp.dtype(jnp.float32) else 1e-3
    assert jnp.allclose(out, ref_out, atol=tol, rtol=tol), \
        float(jnp.max(jnp.abs(out - ref_out)))
    assert jnp.allclose(hid_out, ref_hid, atol=tol, rtol=tol), \
        float(jnp.max(jnp.abs(hid_out - ref_hid)))

    print("KERNEL_OK")
</pallas_src>

<mosaic_0001>
module attributes {stable_mosaic.version = 11 : i64} {
  func.func @_linear_kernel(%arg0: i32, %arg1: i32, %arg2: memref<16x128xbf16, #tpu.memory_space<vmem>>, %arg3: memref<128x384xbf16, #tpu.memory_space<vmem>>, %arg4: memref<1x384xf32, #tpu.memory_space<vmem>>, %arg5: memref<16x384xbf16, #tpu.memory_space<vmem>>) attributes {dimension_semantics = [#tpu.dimension_semantics<parallel>, #tpu.dimension_semantics<parallel>], iteration_bounds = array<i64: 1, 1>, scalar_prefetch = 0 : i64, scratch_operands = 0 : i64, tpu.core_type = #tpu.core_type<tc>, window_params = [{transform_indices = @transform_0, window_bounds = array<i64: 16, 128>}, {transform_indices = @transform_1, window_bounds = array<i64: 128, 384>}, {transform_indices = @transform_2, window_bounds = array<i64: 1, 384>}, {transform_indices = @transform_3, window_bounds = array<i64: 16, 384>}]} {
    %c0 = arith.constant 0 : index
    %c0_0 = arith.constant 0 : index
    %0 = vector.load %arg2[%c0, %c0_0] : memref<16x128xbf16, #tpu.memory_space<vmem>>, vector<16x128xbf16>
    %c0_1 = arith.constant 0 : index
    %c0_2 = arith.constant 0 : index
    %1 = vector.load %arg3[%c0_1, %c0_2] : memref<128x384xbf16, #tpu.memory_space<vmem>>, vector<128x384xbf16>
    %cst = arith.constant dense<0.000000e+00> : vector<16x384xf32>
    %2 = tpu.matmul %0, %1, %cst {dimension_numbers = #tpu.dot_dimension_numbers<[1], [0], [0], [1], [0, 0, 1, 1], [], []>} : vector<16x128xbf16>, vector<128x384xbf16>, vector<16x384xf32> -> vector<16x384xf32>
    %c0_3 = arith.constant 0 : index
    %c0_4 = arith.constant 0 : index
    %3 = vector.load %arg4[%c0_3, %c0_4] : memref<1x384xf32, #tpu.memory_space<vmem>>, vector<1x384xf32>
    %4 = vector.broadcast %3 : vector<1x384xf32> to vector<16x384xf32>
    %5 = arith.addf %2, %4 : vector<16x384xf32>
    %6 = arith.truncf %5 : vector<16x384xf32> to vector<16x384xbf16>
    %c0_5 = arith.constant 0 : index
    %c0_6 = arith.constant 0 : index
    %7 = vector.load %arg5[%c0_5, %c0_6] : memref<16x384xbf16, #tpu.memory_space<vmem>>, vector<16x384xbf16>
    tpu.vector_store %arg5[%c0_5, %c0_6], %6 {strides = array<i32>} : memref<16x384xbf16, #tpu.memory_space<vmem>>, vector<16x384xbf16>,
    return
  }
  func.func @transform_0(%arg0: i32, %arg1: i32) -> (i32, i32) {
    %c0_i32 = arith.constant 0 : i32
    %c0_i32_0 = arith.constant 0 : i32
    return %arg0, %c0_i32 : i32, i32
  }
  func.func @transform_1(%arg0: i32, %arg1: i32) -> (i32, i32) {
    %c0_i32 = arith.constant 0 : i32
    %c0_i32_0 = arith.constant 0 : i32
    return %c0_i32, %arg1 : i32, i32
  }
  func.func @transform_2(%arg0: i32, %arg1: i32) -> (i32, i32) {
    %c0_i32 = arith.constant 0 : i32
    %c0_i32_0 = arith.constant 0 : i32
    return %c0_i32, %arg1 : i32, i32
  }
  func.func @transform_3(%arg0: i32, %arg1: i32) -> (i32, i32) {
    %c0_i32 = arith.constant 0 : i32
    return %arg0, %arg1 : i32, i32
  }
}

module attributes {stable_mosaic.version = 11 : i64} {
  func.func @_linear_kernel(%arg0: i32, %arg1: i32, %arg2: memref<16x4xf32, #tpu.memory_space<vmem>>, %arg3: memref<4x384xbf16, #tpu.memory_space<vmem>>, %arg4: memref<1x384xf32, #tpu.memory_space<vmem>>, %arg5: memref<16x384xbf16, #tpu.memory_space<vmem>>) attributes {dimension_semantics = [#tpu.dimension_semantics<parallel>, #tpu.dimension_semantics<parallel>], iteration_bounds = array<i64: 1, 1>, scalar_prefetch = 0 : i64, scratch_operands = 0 : i64, tpu.core_type = #tpu.core_type<tc>, window_params = [{transform_indices = @transform_0, window_bounds = array<i64: 16, 4>}, {transform_indices = @transform_1, window_bounds = array<i64: 4, 384>}, {transform_indices = @transform_2, window_bounds = array<i64: 1, 384>}, {transform_indices = @transform_3, window_bounds = array<i64: 16, 384>}]} {
    %c0 = arith.constant 0 : index
    %c0_0 = arith.constant 0 : index
    %0 = vector.load %arg2[%c0, %c0_0] : memref<16x4xf32, #tpu.memory_space<vmem>>, vector<16x4xf32>
    %1 = arith.truncf %0 : vector<16x4xf32> to vector<16x4xbf16>
    %c0_1 = arith.constant 0 : index
    %c0_2 = arith.constant 0 : index
    %2 = vector.load %arg3[%c0_1, %c0_2] : memref<4x384xbf16, #tpu.memory_space<vmem>>, vector<4x384xbf16>
    %cst = arith.constant dense<0.000000e+00> : vector<16x384xf32>
    %3 = tpu.matmul %1, %2, %cst {dimension_numbers = #tpu.dot_dimension_numbers<[1], [0], [0], [1], [0, 0, 1, 1], [], []>} : vector<16x4xbf16>, vector<4x384xbf16>, vector<16x384xf32> -> vector<16x384xf32>
    %c0_3 = arith.constant 0 : index
    %c0_4 = arith.constant 0 : index
    %4 = vector.load %arg4[%c0_3, %c0_4] : memref<1x384xf32, #tpu.memory_space<vmem>>, vector<1x384xf32>
    %5 = vector.broadcast %4 : vector<1x384xf32> to vector<16x384xf32>
    %6 = arith.addf %3, %5 : vector<16x384xf32>
    %7 = arith.truncf %6 : vector<16x384xf32> to vector<16x384xbf16>
    %c0_5 = arith.constant 0 : index
    %c0_6 = arith.constant 0 : index
    %8 = vector.load %arg5[%c0_5, %c0_6] : memref<16x384xbf16, #tpu.memory_space<vmem>>, vector<16x384xbf16>
    tpu.vector_store %arg5[%c0_5, %c0_6], %7 {strides = array<i32>} : memref<16x384xbf16, #tpu.memory_space<vmem>>, vector<16x384xbf16>,
    return
  }
  func.func @transform_0(%arg0: i32, %arg1: i32) -> (i32, i32) {
    %c0_i32 = arith.constant 0 : i32
    %c0_i32_0 = arith.constant 0 : i32
    return %arg0, %c0_i32 : i32, i32
  }
  func.func @transform_1(%arg0: i32, %arg1: i32) -> (i32, i32) {
    %c0_i32 = arith.constant 0 : i32
    %c0_i32_0 = arith.constant 0 : i32
    return %c0_i32, %arg1 : i32, i32
  }
  func.func @transform_2(%arg0: i32, %arg1: i32) -> (i32, i32) {
    %c0_i32 = arith.constant 0 : i32
    %c0_i32_0 = arith.constant 0 : i32
    return %c0_i32, %arg1 : i32, i32
  }
  func.func @transform_3(%arg0: i32, %arg1: i32) -> (i32, i32) {
    %c0_i32 = arith.constant 0 : i32
    return %arg0, %arg1 : i32, i32
  }
}

module attributes {stable_mosaic.version = 11 : i64} {
  func.func @kernel(%arg0: i32, %arg1: i32, %arg2: memref<8x2x384xbf16, #tpu.memory_space<vmem>>, %arg3: memref<2x128xf32, #tpu.memory_space<vmem>>, %arg4: memref<128x384xbf16, #tpu.memory_space<vmem>>, %arg5: memref<1x128xf32, #tpu.memory_space<vmem>>, %arg6: memref<8x2x128xbf16, #tpu.memory_space<vmem>>, %arg7: memref<2x128xf32, #tpu.memory_space<vmem>>, %arg8: memref<2x128xf32, #tpu.memory_space<vmem>>) attributes {dimension_semantics = [#tpu.dimension_semantics<parallel>, #tpu.dimension_semantics<arbitrary>], iteration_bounds = array<i64: 1, 1>, scalar_prefetch = 0 : i64, scratch_operands = 1 : i64, tpu.core_type = #tpu.core_type<tc>, window_params = [{transform_indices = @transform_0, window_bounds = array<i64: 8, 2, 384>}, {transform_indices = @transform_1, window_bounds = array<i64: 2, 128>}, {pipeline_mode = #tpu.pipeline_mode<synchronous>, transform_indices = @transform_2, window_bounds = array<i64: 128, 384>}, {pipeline_mode = #tpu.pipeline_mode<synchronous>, transform_indices = @transform_3, window_bounds = array<i64: 1, 128>}, {transform_indices = @transform_4, window_bounds = array<i64: 8, 2, 128>}, {transform_indices = @transform_5, window_bounds = array<i64: 2, 128>}]} {
    %c0_i32 = arith.constant 0 : i32
    %0 = arith.cmpi eq, %arg1, %c0_i32 : i32
    %1 = arith.extui %0 : i1 to i32
    %c0_i32_0 = arith.constant 0 : i32
    %2 = arith.cmpi ne, %1, %c0_i32_0 : i32
    scf.if %2 {
      %c0_74 = arith.constant 0 : index
      %c0_75 = arith.constant 0 : index
      %316 = vector.load %arg3[%c0_74, %c0_75] : memref<2x128xf32, #tpu.memory_space<vmem>>, vector<2x128xf32>
      %c0_76 = arith.constant 0 : index
      %c0_77 = arith.constant 0 : index
      %317 = vector.load %arg8[%c0_76, %c0_77] : memref<2x128xf32, #tpu.memory_space<vmem>>, vector<2x128xf32>
      tpu.vector_store %arg8[%c0_76, %c0_77], %316 {strides = array<i32>} : memref<2x128xf32, #tpu.memory_space<vmem>>, vector<2x128xf32>,
    } else {
    }
    %c0 = arith.constant 0 : index
    %c0_1 = arith.constant 0 : index
    %3 = vector.load %arg4[%c0, %c0_1] : memref<128x384xbf16, #tpu.memory_space<vmem>>, vector<128x384xbf16>
    %c0_2 = arith.constant 0 : index
    %c0_3 = arith.constant 0 : index
    %4 = vector.load %arg5[%c0_2, %c0_3] : memref<1x128xf32, #tpu.memory_space<vmem>>, vector<1x128xf32>
    %5 = vector.shape_cast %4 : vector<1x128xf32> to vector<1x128xf32>
    %6 = vector.broadcast %5 : vector<1x128xf32> to vector<2x128xf32>
    %c0_4 = arith.constant 0 : index
    %c0_5 = arith.constant 0 : index
    %7 = vector.load %arg8[%c0_4, %c0_5] : memref<2x128xf32, #tpu.memory_space<vmem>>, vector<2x128xf32>
    %c0_i32_6 = arith.constant 0 : i32
    %8 = arith.index_cast %c0_i32_6 : i32 to index
    %c0_7 = arith.constant 0 : index
    %c0_8 = arith.constant 0 : index
    %9 = vector.load %arg2[%8, %c0_7, %c0_8] : memref<8x2x384xbf16, #tpu.memory_space<vmem>>, vector<1x2x384xbf16>
    %10 = vector.shape_cast %9 : vector<1x2x384xbf16> to vector<2x384xbf16>
    %11 = arith.extf %10 : vector<2x384xbf16> to vector<2x384xf32>
    %12 = arith.truncf %7 : vector<2x128xf32> to vector<2x128xbf16>
    %cst = arith.constant dense<0.000000e+00> : vector<2x384xf32>
    %13 = tpu.matmul %12, %3, %cst {dimension_numbers = #tpu.dot_dimension_numbers<[1], [0], [0], [1], [0, 0, 1, 1], [], []>} : vector<2x128xbf16>, vector<128x384xbf16>, vector<2x384xf32> -> vector<2x384xf32>
    %14 = vector.extract_strided_slice %11 {offsets = [0, 0], sizes = [2, 128], strides = [1, 1]} : vector<2x384xf32> to vector<2x128xf32>
    %15 = vector.extract_strided_slice %13 {offsets = [0, 0], sizes = [2, 128], strides = [1, 1]} : vector<2x384xf32> to vector<2x128xf32>
    %16 = arith.addf %14, %15 : vector<2x128xf32>
    %17 = arith.negf %16 : vector<2x128xf32>
    %18 = math.exp %17 : vector<2x128xf32>
    %cst_9 = arith.constant 1.000000e+00 : f32
    %19 = vector.broadcast %cst_9 : f32 to vector<2x128xf32>
    %20 = arith.addf %19, %18 : vector<2x128xf32>
    %21 = arith.divf %19, %20 : vector<2x128xf32>
    %22 = vector.extract_strided_slice %11 {offsets = [0, 128], sizes = [2, 128], strides = [1, 1]} : vector<2x384xf32> to vector<2x128xf32>
    %23 = vector.extract_strided_slice %13 {offsets = [0, 128], sizes = [2, 128], strides = [1, 1]} : vector<2x384xf32> to vector<2x128xf32>
    %24 = arith.addf %22, %23 : vector<2x128xf32>
    %25 = arith.negf %24 : vector<2x128xf32>
    %26 = math.exp %25 : vector<2x128xf32>
    %cst_10 = arith.constant 1.000000e+00 : f32
    %27 = vector.broadcast %cst_10 : f32 to vector<2x128xf32>
    %28 = arith.addf %27, %26 : vector<2x128xf32>
    %29 = arith.divf %27, %28 : vector<2x128xf32>
    %30 = vector.extract_strided_slice %11 {offsets = [0, 256], sizes = [2, 128], strides = [1, 1]} : vector<2x384xf32> to vector<2x128xf32>
    %31 = vector.extract_strided_slice %13 {offsets = [0, 256], sizes = [2, 128], strides = [1, 1]} : vector<2x384xf32> to vector<2x128xf32>
    %32 = arith.addf %31, %6 : vector<2x128xf32>
    %33 = arith.mulf %21, %32 : vector<2x128xf32>
    %34 = arith.addf %30, %33 : vector<2x128xf32>
    %35 = math.tanh %34 : vector<2x128xf32>
    %cst_11 = arith.constant 1.000000e+00 : f32
    %36 = vector.broadcast %cst_11 : f32 to vector<2x128xf32>
    %37 = arith.subf %36, %29 : vector<2x128xf32>
    %38 = arith.mulf %37, %35 : vector<2x128xf32>
    %39 = arith.mulf %29, %7 : vector<2x128xf32>
    %40 = arith.addf %38, %39 : vector<2x128xf32>
    %41 = arith.truncf %40 : vector<2x128xf32> to vector<2x128xbf16>
    %42 = arith.index_cast %c0_i32_6 : i32 to index
    %c0_12 = arith.constant 0 : index
    %c0_13 = arith.constant 0 : index
    %43 = vector.load %arg6[%42, %c0_12, %c0_13] : memref<8x2x128xbf16, #tpu.memory_space<vmem>>, vector<1x2x128xbf16>
    %44 = vector.shape_cast %43 : vector<1x2x128xbf16> to vector<2x128xbf16>
    %45 = vector.shape_cast %41 : vector<2x128xbf16> to vector<1x2x128xbf16>
    tpu.vector_store %arg6[%42, %c0_12, %c0_13], %45 {strides = array<i32>} : memref<8x2x128xbf16, #tpu.memory_space<vmem>>, vector<1x2x128xbf16>,
    %c1_i32 = arith.constant 1 : i32
    %46 = arith.index_cast %c1_i32 : i32 to index
    %c0_14 = arith.constant 0 : index
    %c0_15 = arith.constant 0 : index
    %47 = vector.load %arg2[%46, %c0_14, %c0_15] : memref<8x2x384xbf16, #tpu.memory_space<vmem>>, vector<1x2x384xbf16>
    %48 = vector.shape_cast %47 : vector<1x2x384xbf16> to vector<2x384xbf16>
    %49 = arith.extf %48 : vector<2x384xbf16> to vector<2x384xf32>
    %50 = arith.truncf %40 : vector<2x128xf32> to vector<2x128xbf16>
    %cst_16 = arith.constant dense<0.000000e+00> : vector<2x384xf32>
    %51 = tpu.matmul %50, %3, %cst_16 {dimension_numbers = #tpu.dot_dimension_numbers<[1], [0], [0], [1], [0, 0, 1, 1], [], []>} : vector<2x128xbf16>, vector<128x384xbf16>, vector<2x384xf32> -> vector<2x384xf32>
    %52 = vector.extract_strided_slice %49 {offsets = [0, 0], sizes = [2, 128], strides = [1, 1]} : vector<2x384xf32> to vector<2x128xf32>
    %53 = vector.extract_strided_slice %51 {offsets = [0, 0], sizes = [2, 128], strides = [1, 1]} : vector<2x384xf32> to vector<2x128xf32>
    %54 = arith.addf %52, %53 : vector<2x128xf32>
    %55 = arith.negf %54 : vector<2x128xf32>
    %56 = math.exp %55 : vector<2x128xf32>
    %cst_17 = arith.constant 1.000000e+00 : f32
    %57 = vector.broadcast %cst_17 : f32 to vector<2x128xf32>
    %58 = arith.addf %57, %56 : vector<2x128xf32>
    %59 = arith.divf %57, %58 : vector<2x128xf32>
    %60 = vector.extract_strided_slice %49 {offsets = [0, 128], sizes = [2, 128], strides = [1, 1]} : vector<2x384xf32> to vector<2x128xf32>
    %61 = vector.extract_strided_slice %51 {offsets = [0, 128], sizes = [2, 128], strides = [1, 1]} : vector<2x384xf32> to vector<2x128xf32>
    %62 = arith.addf %60, %61 : vector<2x128xf32>
    %63 = arith.negf %62 : vector<2x128xf32>
    %64 = math.exp %63 : vector<2x128xf32>
    %cst_18 = arith.constant 1.000000e+00 : f32
    %65 = vector.broadcast %cst_18 : f32 to vector<2x128xf32>
    %66 = arith.addf %65, %64 : vector<2x128xf32>
    %67 = arith.divf %65, %66 : vector<2x128xf32>
    %68 = vector.extract_strided_slice %49 {offsets = [0, 256], sizes = [2, 128], strides = [1, 1]} : vector<2x384xf32> to vector<2x128xf32>
    %69 = vector.extract_strided_slice %51 {offsets = [0, 256], sizes = [2, 128], strides = [1, 1]} : vector<2x384xf32> to vector<2x128xf32>
    %70 = arith.addf %69, %6 : vector<2x128xf32>
    %71 = arith.mulf %59, %70 : vector<2x128xf32>
    %72 = arith.addf %68, %71 : vector<2x128xf32>
    %73 = math.tanh %72 : vector<2x128xf32>
    %cst_19 = arith.constant 1.000000e+00 : f32
    %74 = vector.broadcast %cst_19 : f32 to vector<2x128xf32>
    %75 = arith.subf %74, %67 : vector<2x128xf32>
    %76 = arith.mulf %75, %73 : vector<2x128xf32>
    %77 = arith.mulf %67, %40 : vector<2x128xf32>
    %78 = arith.addf %76, %77 : vector<2x128xf32>
    %79 = arith.truncf %78 : vector<2x128xf32> to vector<2x128xbf16>
    %80 = arith.index_cast %c1_i32 : i32 to index
    %c0_20 = arith.constant 0 : index
    %c0_21 = arith.constant 0 : index
    %81 = vector.load %arg6[%80, %c0_20, %c0_21] : memref<8x2x128xbf16, #tpu.memory_space<vmem>>, vector<1x2x128xbf16>
    %82 = vector.shape_cast %81 : vector<1x2x128xbf16> to vector<2x128xbf16>
    %83 = vector.shape_cast %79 : vector<2x128xbf16> to vector<1x2x128xbf16>
    tpu.vector_store %arg6[%80, %c0_20, %c0_21], %83 {strides = array<i32>} : memref<8x2x128xbf16, #tpu.memory_space<vmem>>, vector<1x2x128xbf16>,
    %c2_i32 = arith.constant 2 : i32
    %84 = arith.index_cast %c2_i32 : i32 to index
    %c0_22 = arith.constant 0 : index
    %c0_23 = arith.constant 0 : index
    %85 = vector.load %arg2[%84, %c0_22, %c0_23] : memref<8x2x384xbf16, #tpu.memory_space<vmem>>, vector<1x2x384xbf16>
    %86 = vector.shape_cast %85 : vector<1x2x384xbf16> to vector<2x384xbf16>
    %87 = arith.extf %86 : vector<2x384xbf16> to vector<2x384xf32>
    %88 = arith.truncf %78 : vector<2x128xf32> to vector<2x128xbf16>
    %cst_24 = arith.constant dense<0.000000e+00> : vector<2x384xf32>
    %89 = tpu.matmul %88, %3, %cst_24 {dimension_numbers = #tpu.dot_dimension_numbers<[1], [0], [0], [1], [0, 0, 1, 1], [], []>} : vector<2x128xbf16>, vector<128x384xbf16>, vector<2x384xf32> -> vector<2x384xf32>
    %90 = vector.extract_strided_slice %87 {offsets = [0, 0], sizes = [2, 128], strides = [1, 1]} : vector<2x384xf32> to vector<2x128xf32>
    %91 = vector.extract_strided_slice %89 {offsets = [0, 0], sizes = [2, 128], strides = [1, 1]} : vector<2x384xf32> to vector<2x128xf32>
    %92 = arith.addf %90, %91 : vector<2x128xf32>
    %93 = arith.negf %92 : vector<2x128xf32>
    %94 = math.exp %93 : vector<2x128xf32>
    %cst_25 = arith.constant 1.000000e+00 : f32
    %95 = vector.broadcast %cst_25 : f32 to vector<2x128xf32>
    %96 = arith.addf %95, %94 : vector<2x128xf32>
    %97 = arith.divf %95, %96 : vector<2x128xf32>
    %98 = vector.extract_strided_slice %87 {offsets = [0, 128], sizes = [2, 128], strides = [1, 1]} : vector<2x384xf32> to vector<2x128xf32>
    %99 = vector.extract_strided_slice %89 {offsets = [0, 128], sizes = [2, 128], strides = [1, 1]} : vector<2x384xf32> to vector<2x128xf32>
    %100 = arith.addf %98, %99 : vector<2x128xf32>
    %101 = arith.negf %100 : vector<2x128xf32>
    %102 = math.exp %101 : vector<2x128xf32>
    %cst_26 = arith.constant 1.000000e+00 : f32
    %103 = vector.broadcast %cst_26 : f32 to vector<2x128xf32>
    %104 = arith.addf %103, %102 : vector<2x128xf32>
    %105 = arith.divf %103, %104 : vector<2x128xf32>
    %106 = vector.extract_strided_slice %87 {offsets = [0, 256], sizes = [2, 128], strides = [1, 1]} : vector<2x384xf32> to vector<2x128xf32>
    %107 = vector.extract_strided_slice %89 {offsets = [0, 256], sizes = [2, 128], strides = [1, 1]} : vector<2x384xf32> to vector<2x128xf32>
    %108 = arith.addf %107, %6 : vector<2x128xf32>
    %109 = arith.mulf %97, %108 : vector<2x128xf32>
    %110 = arith.addf %106, %109 : vector<2x128xf32>
    %111 = math.tanh %110 : vector<2x128xf32>
    %cst_27 = arith.constant 1.000000e+00 : f32
    %112 = vector.broadcast %cst_27 : f32 to vector<2x128xf32>
    %113 = arith.subf %112, %105 : vector<2x128xf32>
    %114 = arith.mulf %113, %111 : vector<2x128xf32>
    %115 = arith.mulf %105, %78 : vector<2x128xf32>
    %116 = arith.addf %114, %115 : vector<2x128xf32>
    %117 = arith.truncf %116 : vector<2x128xf32> to vector<2x128xbf16>
    %118 = arith.index_cast %c2_i32 : i32 to index
    %c0_28 = arith.constant 0 : index
    %c0_29 = arith.constant 0 : index
    %119 = vector.load %arg6[%118, %c0_28, %c0_29] : memref<8x2x128xbf16, #tpu.memory_space<vmem>>, vector<1x2x128xbf16>
    %120 = vector.shape_cast %119 : vector<1x2x128xbf16> to vector<2x128xbf16>
    %121 = vector.shape_cast %117 : vector<2x128xbf16> to vector<1x2x128xbf16>
    tpu.vector_store %arg6[%118, %c0_28, %c0_29], %121 {strides = array<i32>} : memref<8x2x128xbf16, #tpu.memory_space<vmem>>, vector<1x2x128xbf16>,
    %c3_i32 = arith.constant 3 : i32
    %122 = arith.index_cast %c3_i32 : i32 to index
    %c0_30 = arith.constant 0 : index
    %c0_31 = arith.constant 0 : index
    %123 = vector.load %arg2[%122, %c0_30, %c0_31] : memref<8x2x384xbf16, #tpu.memory_space<vmem>>, vector<1x2x384xbf16>
    %124 = vector.shape_cast %123 : vector<1x2x384xbf16> to vector<2x384xbf16>
    %125 = arith.extf %124 : vector<2x384xbf16> to vector<2x384xf32>
    %126 = arith.truncf %116 : vector<2x128xf32> to vector<2x128xbf16>
    %cst_32 = arith.constant dense<0.000000e+00> : vector<2x384xf32>
    %127 = tpu.matmul %126, %3, %cst_32 {dimension_numbers = #tpu.dot_dimension_numbers<[1], [0], [0], [1], [0, 0, 1, 1], [], []>} : vector<2x128xbf16>, vector<128x384xbf16>, vector<2x384xf32> -> vector<2x384xf32>
    %128 = vector.extract_strided_slice %125 {offsets = [0, 0], sizes = [2, 128], strides = [1, 1]} : vector<2x384xf32> to vector<2x128xf32>
    %129 = vector.extract_strided_slice %127 {offsets = [0, 0], sizes = [2, 128], strides = [1, 1]} : vector<2x384xf32> to vector<2x128xf32>
    %130 = arith.addf %128, %129 : vector<2x128xf32>
    %131 = arith.negf %130 : vector<2x128xf32>
    %132 = math.exp %131 : vector<2x128xf32>
    %cst_33 = arith.constant 1.000000e+00 : f32
    %133 = vector.broadcast %cst_33 : f32 to vector<2x128xf32>
    %134 = arith.addf %133, %132 : vector<2x128xf32>
    %135 = arith.divf %133, %134 : vector<2x128xf32>
    %136 = vector.extract_strided_slice %125 {offsets = [0, 128], sizes = [2, 128], strides = [1, 1]} : vector<2x384xf32> to vector<2x128xf32>
    %137 = vector.extract_strided_slice %127 {offsets = [0, 128], sizes = [2, 128], strides = [1, 1]} : vector<2x384xf32> to vector<2x128xf32>
    %138 = arith.addf %136, %137 : vector<2x128xf32>
    %139 = arith.negf %138 : vector<2x128xf32>
    %140 = math.exp %139 : vector<2x128xf32>
    %cst_34 = arith.constant 1.000000e+00 : f32
    %141 = vector.broadcast %cst_34 : f32 to vector<2x128xf32>
    %142 = arith.addf %141, %140 : vector<2x128xf32>
    %143 = arith.divf %141, %142 : vector<2x128xf32>
    %144 = vector.extract_strided_slice %125 {offsets = [0, 256], sizes = [2, 128], strides = [1, 1]} : vector<2x384xf32> to vector<2x128xf32>
    %145 = vector.extract_strided_slice %127 {offsets = [0, 256], sizes = [2, 128], strides = [1, 1]} : vector<2x384xf32> to vector<2x128xf32>
    %146 = arith.addf %145, %6 : vector<2x128xf32>
    %147 = arith.mulf %135, %146 : vector<2x128xf32>
    %148 = arith.addf %144, %147 : vector<2x128xf32>
    %149 = math.tanh %148 : vector<2x128xf32>
    %cst_35 = arith.constant 1.000000e+00 : f32
    %150 = vector.broadcast %cst_35 : f32 to vector<2x128xf32>
    %151 = arith.subf %150, %143 : vector<2x128xf32>
    %152 = arith.mulf %151, %149 : vector<2x128xf32>
    %153 = arith.mulf %143, %116 : vector<2x128xf32>
    %154 = arith.addf %152, %153 : vector<2x128xf32>
    %155 = arith.truncf %154 : vector<2x128xf32> to vector<2x128xbf16>
    %156 = arith.index_cast %c3_i32 : i32 to index
    %c0_36 = arith.constant 0 : index
    %c0_37 = arith.constant 0 : index
    %157 = vector.load %arg6[%156, %c0_36, %c0_37] : memref<8x2x128xbf16, #tpu.memory_space<vmem>>, vector<1x2x128xbf16>
    %158 = vector.shape_cast %157 : vector<1x2x128xbf16> to vector<2x128xbf16>
    %159 = vector.shape_cast %155 : vector<2x128xbf16> to vector<1x2x128xbf16>
    tpu.vector_store %arg6[%156, %c0_36, %c0_37], %159 {strides = array<i32>} : memref<8x2x128xbf16, #tpu.memory_space<vmem>>, vector<1x2x128xbf16>,
    %c4_i32 = arith.constant 4 : i32
    %160 = arith.index_cast %c4_i32 : i32 to index
    %c0_38 = arith.constant 0 : index
    %c0_39 = arith.constant 0 : index
    %161 = vector.load %arg2[%160, %c0_38, %c0_39] : memref<8x2x384xbf16, #tpu.memory_space<vmem>>, vector<1x2x384xbf16>
    %162 = vector.shape_cast %161 : vector<1x2x384xbf16> to vector<2x384xbf16>
    %163 = arith.extf %162 : vector<2x384xbf16> to vector<2x384xf32>
    %164 = arith.truncf %154 : vector<2x128xf32> to vector<2x128xbf16>
    %cst_40 = arith.constant dense<0.000000e+00> : vector<2x384xf32>
    %165 = tpu.matmul %164, %3, %cst_40 {dimension_numbers = #tpu.dot_dimension_numbers<[1], [0], [0], [1], [0, 0, 1, 1], [], []>} : vector<2x128xbf16>, vector<128x384xbf16>, vector<2x384xf32> -> vector<2x384xf32>
    %166 = vector.extract_strided_slice %163 {offsets = [0, 0], sizes = [2, 128], strides = [1, 1]} : vector<2x384xf32> to vector<2x128xf32>
    %167 = vector.extract_strided_slice %165 {offsets = [0, 0], sizes = [2, 128], strides = [1, 1]} : vector<2x384xf32> to vector<2x128xf32>
    %168 = arith.addf %166, %167 : vector<2x128xf32>
    %169 = arith.negf %168 : vector<2x128xf32>
    %170 = math.exp %169 : vector<2x128xf32>
    %cst_41 = arith.constant 1.000000e+00 : f32
    %171 = vector.broadcast %cst_41 : f32 to vector<2x128xf32>
    %172 = arith.addf %171, %170 : vector<2x128xf32>
    %173 = arith.divf %171, %172 : vector<2x128xf32>
    %174 = vector.extract_strided_slice %163 {offsets = [0, 128], sizes = [2, 128], strides = [1, 1]} : vector<2x384xf32> to vector<2x128xf32>
    %175 = vector.extract_strided_slice %165 {offsets = [0, 128], sizes = [2, 128], strides = [1, 1]} : vector<2x384xf32> to vector<2x128xf32>
    %176 = arith.addf %174, %175 : vector<2x128xf32>
    %177 = arith.negf %176 : vector<2x128xf32>
    %178 = math.exp %177 : vector<2x128xf32>
    %cst_42 = arith.constant 1.000000e+00 : f32
    %179 = vector.broadcast %cst_42 : f32 to vector<2x128xf32>
    %180 = arith.addf %179, %178 : vector<2x128xf32>
    %181 = arith.divf %179, %180 : vector<2x128xf32>
    %182 = vector.extract_strided_slice %163 {offsets = [0, 256], sizes = [2, 128], strides = [1, 1]} : vector<2x384xf32> to vector<2x128xf32>
    %183 = vector.extract_strided_slice %165 {offsets = [0, 256], sizes = [2, 128], strides = [1, 1]} : vector<2x384xf32> to vector<2x128xf32>
    %184 = arith.addf %183, %6 : vector<2x128xf32>
    %185 = arith.mulf %173, %184 : vector<2x128xf32>
    %186 = arith.addf %182, %185 : vector<2x128xf32>
    %187 = math.tanh %186 : vector<2x128xf32>
    %cst_43 = arith.constant 1.000000e+00 : f32
    %188 = vector.broadcast %cst_43 : f32 to vector<2x128xf32>
    %189 = arith.subf %188, %181 : vector<2x128xf32>
    %190 = arith.mulf %189, %187 : vector<2x128xf32>
    %191 = arith.mulf %181, %154 : vector<2x128xf32>
    %192 = arith.addf %190, %191 : vector<2x128xf32>
    %193 = arith.truncf %192 : vector<2x128xf32> to vector<2x128xbf16>
    %194 = arith.index_cast %c4_i32 : i32 to index
    %c0_44 = arith.constant 0 : index
    %c0_45 = arith.constant 0 : index
    %195 = vector.load %arg6[%194, %c0_44, %c0_45] : memref<8x2x128xbf16, #tpu.memory_space<vmem>>, vector<1x2x128xbf16>
    %196 = vector.shape_cast %195 : vector<1x2x128xbf16> to vector<2x128xbf16>
    %197 = vector.shape_cast %193 : vector<2x128xbf16> to vector<1x2x128xbf16>
    tpu.vector_store %arg6[%194, %c0_44, %c0_45], %197 {strides = array<i32>} : memref<8x2x128xbf16, #tpu.memory_space<vmem>>, vector<1x2x128xbf16>,
    %c5_i32 = arith.constant 5 : i32
    %198 = arith.index_cast %c5_i32 : i32 to index
    %c0_46 = arith.constant 0 : index
    %c0_47 = arith.constant 0 : index
    %199 = vector.load %arg2[%198, %c0_46, %c0_47] : memref<8x2x384xbf16, #tpu.memory_space<vmem>>, vector<1x2x384xbf16>
    %200 = vector.shape_cast %199 : vector<1x2x384xbf16> to vector<2x384xbf16>
    %201 = arith.extf %200 : vector<2x384xbf16> to vector<2x384xf32>
    %202 = arith.truncf %192 : vector<2x128xf32> to vector<2x128xbf16>
    %cst_48 = arith.constant dense<0.000000e+00> : vector<2x384xf32>
    %203 = tpu.matmul %202, %3, %cst_48 {dimension_numbers = #tpu.dot_dimension_numbers<[1], [0], [0], [1], [0, 0, 1, 1], [], []>} : vector<2x128xbf16>, vector<128x384xbf16>, vector<2x384xf32> -> vector<2x384xf32>
    %204 = vector.extract_strided_slice %201 {offsets = [0, 0], sizes = [2, 128], strides = [1, 1]} : vector<2x384xf32> to vector<2x128xf32>
    %205 = vector.extract_strided_slice %203 {offsets = [0, 0], sizes = [2, 128], strides = [1, 1]} : vector<2x384xf32> to vector<2x128xf32>
    %206 = arith.addf %204, %205 : vector<2x128xf32>
    %207 = arith.negf %206 : vector<2x128xf32>
    %208 = math.exp %207 : vector<2x128xf32>
    %cst_49 = arith.constant 1.000000e+00 : f32
    %209 = vector.broadcast %cst_49 : f32 to vector<2x128xf32>
    %210 = arith.addf %209, %208 : vector<2x128xf32>
    %211 = arith.divf %209, %210 : vector<2x128xf32>
    %212 = vector.extract_strided_slice %201 {offsets = [0, 128], sizes = [2, 128], strides = [1, 1]} : vector<2x384xf32> to vector<2x128xf32>
    %213 = vector.extract_strided_slice %203 {offsets = [0, 128], sizes = [2, 128], strides = [1, 1]} : vector<2x384xf32> to vector<2x128xf32>
    %214 = arith.addf %212, %213 : vector<2x128xf32>
    %215 = arith.negf %214 : vector<2x128xf32>
    %216 = math.exp %215 : vector<2x128xf32>
    %cst_50 = arith.constant 1.000000e+00 : f32
    %217 = vector.broadcast %cst_50 : f32 to vector<2x128xf32>
    %218 = arith.addf %217, %216 : vector<2x128xf32>
    %219 = arith.divf %217, %218 : vector<2x128xf32>
    %220 = vector.extract_strided_slice %201 {offsets = [0, 256], sizes = [2, 128], strides = [1, 1]} : vector<2x384xf32> to vector<2x128xf32>
    %221 = vector.extract_strided_slice %203 {offsets = [0, 256], sizes = [2, 128], strides = [1, 1]} : vector<2x384xf32> to vector<2x128xf32>
    %222 = arith.addf %221, %6 : vector<2x128xf32>
    %223 = arith.mulf %211, %222 : vector<2x128xf32>
    %224 = arith.addf %220, %223 : vector<2x128xf32>
    %225 = math.tanh %224 : vector<2x128xf32>
    %cst_51 = arith.constant 1.000000e+00 : f32
    %226 = vector.broadcast %cst_51 : f32 to vector<2x128xf32>
    %227 = arith.subf %226, %219 : vector<2x128xf32>
    %228 = arith.mulf %227, %225 : vector<2x128xf32>
    %229 = arith.mulf %219, %192 : vector<2x128xf32>
    %230 = arith.addf %228, %229 : vector<2x128xf32>
    %231 = arith.truncf %230 : vector<2x128xf32> to vector<2x128xbf16>
    %232 = arith.index_cast %c5_i32 : i32 to index
    %c0_52 = arith.constant 0 : index
    %c0_53 = arith.constant 0 : index
    %233 = vector.load %arg6[%232, %c0_52, %c0_53] : memref<8x2x128xbf16, #tpu.memory_space<vmem>>, vector<1x2x128xbf16>
    %234 = vector.shape_cast %233 : vector<1x2x128xbf16> to vector<2x128xbf16>
    %235 = vector.shape_cast %231 : vector<2x128xbf16> to vector<1x2x128xbf16>
    tpu.vector_store %arg6[%232, %c0_52, %c0_53], %235 {strides = array<i32>} : memref<8x2x128xbf16, #tpu.memory_space<vmem>>, vector<1x2x128xbf16>,
    %c6_i32 = arith.constant 6 : i32
    %236 = arith.index_cast %c6_i32 : i32 to index
    %c0_54 = arith.constant 0 : index
    %c0_55 = arith.constant 0 : index
    %237 = vector.load %arg2[%236, %c0_54, %c0_55] : memref<8x2x384xbf16, #tpu.memory_space<vmem>>, vector<1x2x384xbf16>
    %238 = vector.shape_cast %237 : vector<1x2x384xbf16> to vector<2x384xbf16>
    %239 = arith.extf %238 : vector<2x384xbf16> to vector<2x384xf32>
    %240 = arith.truncf %230 : vector<2x128xf32> to vector<2x128xbf16>
    %cst_56 = arith.constant dense<0.000000e+00> : vector<2x384xf32>
    %241 = tpu.matmul %240, %3, %cst_56 {dimension_numbers = #tpu.dot_dimension_numbers<[1], [0], [0], [1], [0, 0, 1, 1], [], []>} : vector<2x128xbf16>, vector<128x384xbf16>, vector<2x384xf32> -> vector<2x384xf32>
    %242 = vector.extract_strided_slice %239 {offsets = [0, 0], sizes = [2, 128], strides = [1, 1]} : vector<2x384xf32> to vector<2x128xf32>
    %243 = vector.extract_strided_slice %241 {offsets = [0, 0], sizes = [2, 128], strides = [1, 1]} : vector<2x384xf32> to vector<2x128xf32>
    %244 = arith.addf %242, %243 : vector<2x128xf32>
    %245 = arith.negf %244 : vector<2x128xf32>
    %246 = math.exp %245 : vector<2x128xf32>
    %cst_57 = arith.constant 1.000000e+00 : f32
    %247 = vector.broadcast %cst_57 : f32 to vector<2x128xf32>
    %248 = arith.addf %247, %246 : vector<2x128xf32>
    %249 = arith.divf %247, %248 : vector<2x128xf32>
    %250 = vector.extract_strided_slice %239 {offsets = [0, 128], sizes = [2, 128], strides = [1, 1]} : vector<2x384xf32> to vector<2x128xf32>
    %251 = vector.extract_strided_slice %241 {offsets = [0, 128], sizes = [2, 128], strides = [1, 1]} : vector<2x384xf32> to vector<2x128xf32>
    %252 = arith.addf %250, %251 : vector<2x128xf32>
    %253 = arith.negf %252 : vector<2x128xf32>
    %254 = math.exp %253 : vector<2x128xf32>
    %cst_58 = arith.constant 1.000000e+00 : f32
    %255 = vector.broadcast %cst_58 : f32 to vector<2x128xf32>
    %256 = arith.addf %255, %254 : vector<2x128xf32>
    %257 = arith.divf %255, %256 : vector<2x128xf32>
    %258 = vector.extract_strided_slice %239 {offsets = [0, 256], sizes = [2, 128], strides = [1, 1]} : vector<2x384xf32> to vector<2x128xf32>
    %259 = vector.extract_strided_slice %241 {offsets = [0, 256], sizes = [2, 128], strides = [1, 1]} : vector<2x384xf32> to vector<2x128xf32>
    %260 = arith.addf %259, %6 : vector<2x128xf32>
    %261 = arith.mulf %249, %260 : vector<2x128xf32>
    %262 = arith.addf %258, %261 : vector<2x128xf32>
    %263 = math.tanh %262 : vector<2x128xf32>
    %cst_59 = arith.constant 1.000000e+00 : f32
    %264 = vector.broadcast %cst_59 : f32 to vector<2x128xf32>
    %265 = arith.subf %264, %257 : vector<2x128xf32>
    %266 = arith.mulf %265, %263 : vector<2x128xf32>
    %267 = arith.mulf %257, %230 : vector<2x128xf32>
    %268 = arith.addf %266, %267 : vector<2x128xf32>
    %269 = arith.truncf %268 : vector<2x128xf32> to vector<2x128xbf16>
    %270 = arith.index_cast %c6_i32 : i32 to index
    %c0_60 = arith.constant 0 : index
    %c0_61 = arith.constant 0 : index
    %271 = vector.load %arg6[%270, %c0_60, %c0_61] : memref<8x2x128xbf16, #tpu.memory_space<vmem>>, vector<1x2x128xbf16>
    %272 = vector.shape_cast %271 : vector<1x2x128xbf16> to vector<2x128xbf16>
    %273 = vector.shape_cast %269 : vector<2x128xbf16> to vector<1x2x128xbf16>
    tpu.vector_store %arg6[%270, %c0_60, %c0_61], %273 {strides = array<i32>} : memref<8x2x128xbf16, #tpu.memory_space<vmem>>, vector<1x2x128xbf16>,
    %c7_i32 = arith.constant 7 : i32
    %274 = arith.index_cast %c7_i32 : i32 to index
    %c0_62 = arith.constant 0 : index
    %c0_63 = arith.constant 0 : index
    %275 = vector.load %arg2[%274, %c0_62, %c0_63] : memref<8x2x384xbf16, #tpu.memory_space<vmem>>, vector<1x2x384xbf16>
    %276 = vector.shape_cast %275 : vector<1x2x384xbf16> to vector<2x384xbf16>
    %277 = arith.extf %276 : vector<2x384xbf16> to vector<2x384xf32>
    %278 = arith.truncf %268 : vector<2x128xf32> to vector<2x128xbf16>
    %cst_64 = arith.constant dense<0.000000e+00> : vector<2x384xf32>
    %279 = tpu.matmul %278, %3, %cst_64 {dimension_numbers = #tpu.dot_dimension_numbers<[1], [0], [0], [1], [0, 0, 1, 1], [], []>} : vector<2x128xbf16>, vector<128x384xbf16>, vector<2x384xf32> -> vector<2x384xf32>
    %280 = vector.extract_strided_slice %277 {offsets = [0, 0], sizes = [2, 128], strides = [1, 1]} : vector<2x384xf32> to vector<2x128xf32>
    %281 = vector.extract_strided_slice %279 {offsets = [0, 0], sizes = [2, 128], strides = [1, 1]} : vector<2x384xf32> to vector<2x128xf32>
    %282 = arith.addf %280, %281 : vector<2x128xf32>
    %283 = arith.negf %282 : vector<2x128xf32>
    %284 = math.exp %283 : vector<2x128xf32>
    %cst_65 = arith.constant 1.000000e+00 : f32
    %285 = vector.broadcast %cst_65 : f32 to vector<2x128xf32>
    %286 = arith.addf %285, %284 : vector<2x128xf32>
    %287 = arith.divf %285, %286 : vector<2x128xf32>
    %288 = vector.extract_strided_slice %277 {offsets = [0, 128], sizes = [2, 128], strides = [1, 1]} : vector<2x384xf32> to vector<2x128xf32>
    %289 = vector.extract_strided_slice %279 {offsets = [0, 128], sizes = [2, 128], strides = [1, 1]} : vector<2x384xf32> to vector<2x128xf32>
    %290 = arith.addf %288, %289 : vector<2x128xf32>
    %291 = arith.negf %290 : vector<2x128xf32>
    %292 = math.exp %291 : vector<2x128xf32>
    %cst_66 = arith.constant 1.000000e+00 : f32
    %293 = vector.broadcast %cst_66 : f32 to vector<2x128xf32>
    %294 = arith.addf %293, %292 : vector<2x128xf32>
    %295 = arith.divf %293, %294 : vector<2x128xf32>
    %296 = vector.extract_strided_slice %277 {offsets = [0, 256], sizes = [2, 128], strides = [1, 1]} : vector<2x384xf32> to vector<2x128xf32>
    %297 = vector.extract_strided_slice %279 {offsets = [0, 256], sizes = [2, 128], strides = [1, 1]} : vector<2x384xf32> to vector<2x128xf32>
    %298 = arith.addf %297, %6 : vector<2x128xf32>
    %299 = arith.mulf %287, %298 : vector<2x128xf32>
    %300 = arith.addf %296, %299 : vector<2x128xf32>
    %301 = math.tanh %300 : vector<2x128xf32>
    %cst_67 = arith.constant 1.000000e+00 : f32
    %302 = vector.broadcast %cst_67 : f32 to vector<2x128xf32>
    %303 = arith.subf %302, %295 : vector<2x128xf32>
    %304 = arith.mulf %303, %301 : vector<2x128xf32>
    %305 = arith.mulf %295, %268 : vector<2x128xf32>
    %306 = arith.addf %304, %305 : vector<2x128xf32>
    %307 = arith.truncf %306 : vector<2x128xf32> to vector<2x128xbf16>
    %308 = arith.index_cast %c7_i32 : i32 to index
    %c0_68 = arith.constant 0 : index
    %c0_69 = arith.constant 0 : index
    %309 = vector.load %arg6[%308, %c0_68, %c0_69] : memref<8x2x128xbf16, #tpu.memory_space<vmem>>, vector<1x2x128xbf16>
    %310 = vector.shape_cast %309 : vector<1x2x128xbf16> to vector<2x128xbf16>
    %311 = vector.shape_cast %307 : vector<2x128xbf16> to vector<1x2x128xbf16>
    tpu.vector_store %arg6[%308, %c0_68, %c0_69], %311 {strides = array<i32>} : memref<8x2x128xbf16, #tpu.memory_space<vmem>>, vector<1x2x128xbf16>,
    %c8_i32 = arith.constant 8 : i32
    %c0_70 = arith.constant 0 : index
    %c0_71 = arith.constant 0 : index
    %312 = vector.load %arg8[%c0_70, %c0_71] : memref<2x128xf32, #tpu.memory_space<vmem>>, vector<2x128xf32>
    tpu.vector_store %arg8[%c0_70, %c0_71], %306 {strides = array<i32>} : memref<2x128xf32, #tpu.memory_space<vmem>>, vector<2x128xf32>,
    %c0_i32_72 = arith.constant 0 : i32
    %313 = arith.cmpi eq, %arg1, %c0_i32_72 : i32
    %314 = arith.extui %313 : i1 to i32
    %c0_i32_73 = arith.constant 0 : i32
    %315 = arith.cmpi ne, %314, %c0_i32_73 : i32
    scf.if %315 {
      %c0_74 = arith.constant 0 : index
      %c0_75 = arith.constant 0 : index
      %316 = vector.load %arg7[%c0_74, %c0_75] : memref<2x128xf32, #tpu.memory_space<vmem>>, vector<2x128xf32>
      tpu.vector_store %arg7[%c0_74, %c0_75], %306 {strides = array<i32>} : memref<2x128xf32, #tpu.memory_space<vmem>>, vector<2x128xf32>,
    } else {
    }
    return
  }
  func.func @transform_0(%arg0: i32, %arg1: i32) -> (i32, i32, i32) {
    %c0_i32 = arith.constant 0 : i32
    %c0_i32_0 = arith.constant 0 : i32
    return %arg1, %arg0, %c0_i32 : i32, i32, i32
  }
  func.func @transform_1(%arg0: i32, %arg1: i32) -> (i32, i32) {
    %c0_i32 = arith.constant 0 : i32
    %c0_i32_0 = arith.constant 0 : i32
    return %arg0, %c0_i32 : i32, i32
  }
  func.func @transform_2(%arg0: i32, %arg1: i32) -> (i32, i32) {
    %c0_i32 = arith.constant 0 : i32
    %c0_i32_0 = arith.constant 0 : i32
    %c0_i32_1 = arith.constant 0 : i32
    return %c0_i32, %c0_i32_0 : i32, i32
  }
  func.func @transform_3(%arg0: i32, %arg1: i32) -> (i32, i32) {
    %c0_i32 = arith.constant 0 : i32
    %c0_i32_0 = arith.constant 0 : i32
    %c0_i32_1 = arith.constant 0 : i32
    return %c0_i32, %c0_i32_0 : i32, i32
  }
  func.func @transform_4(%arg0: i32, %arg1: i32) -> (i32, i32, i32) {
    %c0_i32 = arith.constant 0 : i32
    %c0_i32_0 = arith.constant 0 : i32
    return %arg1, %arg0, %c0_i32 : i32, i32, i32
  }
  func.func @transform_5(%arg0: i32, %arg1: i32) -> (i32, i32) {
    %c0_i32 = arith.constant 0 : i32
    %c0_i32_0 = arith.constant 0 : i32
    return %arg0, %c0_i32 : i32, i32
  }
}

module attributes {stable_mosaic.version = 11 : i64} {
  func.func @_linear_kernel(%arg0: i32, %arg1: i32, %arg2: memref<16x128xbf16, #tpu.memory_space<vmem>>, %arg3: memref<128x128xbf16, #tpu.memory_space<vmem>>, %arg4: memref<1x128xf32, #tpu.memory_space<vmem>>, %arg5: memref<16x128xf32, #tpu.memory_space<vmem>>) attributes {dimension_semantics = [#tpu.dimension_semantics<parallel>, #tpu.dimension_semantics<parallel>], iteration_bounds = array<i64: 1, 1>, scalar_prefetch = 0 : i64, scratch_operands = 0 : i64, tpu.core_type = #tpu.core_type<tc>, window_params = [{transform_indices = @transform_0, window_bounds = array<i64: 16, 128>}, {transform_indices = @transform_1, window_bounds = array<i64: 128, 128>}, {transform_indices = @transform_2, window_bounds = array<i64: 1, 128>}, {transform_indices = @transform_3, window_bounds = array<i64: 16, 128>}]} {
    %c0 = arith.constant 0 : index
    %c0_0 = arith.constant 0 : index
    %0 = vector.load %arg2[%c0, %c0_0] : memref<16x128xbf16, #tpu.memory_space<vmem>>, vector<16x128xbf16>
    %c0_1 = arith.constant 0 : index
    %c0_2 = arith.constant 0 : index
    %1 = vector.load %arg3[%c0_1, %c0_2] : memref<128x128xbf16, #tpu.memory_space<vmem>>, vector<128x128xbf16>
    %cst = arith.constant dense<0.000000e+00> : vector<16x128xf32>
    %2 = tpu.matmul %0, %1, %cst {dimension_numbers = #tpu.dot_dimension_numbers<[1], [0], [0], [1], [0, 0, 1, 1], [], []>} : vector<16x128xbf16>, vector<128x128xbf16>, vector<16x128xf32> -> vector<16x128xf32>
    %c0_3 = arith.constant 0 : index
    %c0_4 = arith.constant 0 : index
    %3 = vector.load %arg4[%c0_3, %c0_4] : memref<1x128xf32, #tpu.memory_space<vmem>>, vector<1x128xf32>
    %4 = vector.broadcast %3 : vector<1x128xf32> to vector<16x128xf32>
    %5 = arith.addf %2, %4 : vector<16x128xf32>
    %c0_5 = arith.constant 0 : index
    %c0_6 = arith.constant 0 : index
    %6 = vector.load %arg5[%c0_5, %c0_6] : memref<16x128xf32, #tpu.memory_space<vmem>>, vector<16x128xf32>
    tpu.vector_store %arg5[%c0_5, %c0_6], %5 {strides = array<i32>} : memref<16x128xf32, #tpu.memory_space<vmem>>, vector<16x128xf32>,
    return
  }
  func.func @transform_0(%arg0: i32, %arg1: i32) -> (i32, i32) {
    %c0_i32 = arith.constant 0 : i32
    %c0_i32_0 = arith.constant 0 : i32
    return %arg0, %c0_i32 : i32, i32
  }
  func.func @transform_1(%arg0: i32, %arg1: i32) -> (i32, i32) {
    %c0_i32 = arith.constant 0 : i32
    %c0_i32_0 = arith.constant 0 : i32
    return %c0_i32, %arg1 : i32, i32
  }
  func.func @transform_2(%arg0: i32, %arg1: i32) -> (i32, i32) {
    %c0_i32 = arith.constant 0 : i32
    %c0_i32_0 = arith.constant 0 : i32
    return %c0_i32, %arg1 : i32, i32
  }
  func.func @transform_3(%arg0: i32, %arg1: i32) -> (i32, i32) {
    %c0_i32 = arith.constant 0 : i32
    return %arg0, %arg1 : i32, i32
  }
}

</mosaic_0001>

<llo_original>
// kernel: creation_rnn_forward.7
$region0: #{creation_rnn_forward.7}
  #allocation0 [shape = 'u32[]', space=smem, size = 0x4, offset = 0x4, fixed_abs, tag = 'smem constant byte address 0x4 - core index']
  #allocation1 [shape = 'u32[144,128]{1,0:T(1,128)}', space=vmem, size = 0x12000, scoped, tag = 'internal scratch']
  %s0 = inlined_call_operand.vmem [shape: bf16[16,128], index: 0, kind: input, shape index: {}]
  %s1 = inlined_call_operand.vmem [shape: bf16[128,384], index: 1, kind: input, shape index: {}]
  %s2 = inlined_call_operand.vmem [shape: f32[1,384], index: 2, kind: input, shape index: {}]
  %s3 = inlined_call_operand.vmem [shape: bf16[16,384], index: 3, kind: output, shape index: {}]
  %s4 = sld [smem:[#allocation0]]
  $region22: #{creation_rnn_forward.7} parent=0
    _
  %s6 = ssub.s32 1, %s4
  %s7 = scalar_select 0, %s6, %s4
  // Predicated region
  $region2: #{creation_rnn_forward.7} parent=0 // pred_check
    _
  $region3: #{creation_rnn_forward.7} parent=0 // pred_check_branch
    %9 = sbr.rel (0) target = $region5
  $region4: #{creation_rnn_forward.7} parent=0 // pred_region
    _
  $region5: #{creation_rnn_forward.7} parent=0 // pred_fallthru
    _
  // Predicated region
  $region6: #{creation_rnn_forward.7} parent=0 // pred_check
    _
  $region7: #{creation_rnn_forward.7} parent=0 // pred_check_branch
    %11 = sbr.rel (0) target = $region9
  $region8: #{creation_rnn_forward.7} parent=0 // pred_region
    _
  $region9: #{creation_rnn_forward.7} parent=0 // pred_fallthru
    _
  // Predicated region
  $region10: #{creation_rnn_forward.7} parent=0 // pred_check
    _
  $region11: #{creation_rnn_forward.7} parent=0 // pred_check_branch
    %13 = sbr.rel (0) target = $region13
  $region12: #{creation_rnn_forward.7} parent=0 // pred_region
    _
  $region13: #{creation_rnn_forward.7} parent=0 // pred_fallthru
    _
  %v15 = vld [vmem:[%s0] sm:$0xf]
  %v16 = vld [vmem:[%s0 + $0x4] sm:$0xf]
  %v17 = vld [vmem:[%s1] sm:$0xff]
  %v18 = vld [vmem:[%s1 + $0x8] sm:$0xf]
  %v19 = vld [vmem:[%s1 + $0xc] sm:$0xff]
  %v20 = vld [vmem:[%s1 + $0x14] sm:$0xf]
  %v21 = vld [vmem:[%s1 + $0x18] sm:$0xff]
  %v22 = vld [vmem:[%s1 + $0x20] sm:$0xf]
  %v23 = vld [vmem:[%s1 + $0x24] sm:$0xff]
  %v24 = vld [vmem:[%s1 + $0x2c] sm:$0xf]
  %v25 = vld [vmem:[%s1 + $0x30] sm:$0xff]
  %v26 = vld [vmem:[%s1 + $0x38] sm:$0xf]
  %v27 = vld [vmem:[%s1 + $0x3c] sm:$0xff]
  %v28 = vld [vmem:[%s1 + $0x44] sm:$0xf]
  %v29 = vld [vmem:[%s1 + $0x48] sm:$0xff]
  %v30 = vld [vmem:[%s1 + $0x50] sm:$0xf]
  %v31 = vld [vmem:[%s1 + $0x54] sm:$0xff]
  %v32 = vld [vmem:[%s1 + $0x5c] sm:$0xf]
  %v33 = vld [vmem:[%s1 + $0x60] sm:$0xff]
  %v34 = vld [vmem:[%s1 + $0x68] sm:$0xf]
  %v35 = vld [vmem:[%s1 + $0x6c] sm:$0xff]
  %v36 = vld [vmem:[%s1 + $0x74] sm:$0xf]
  %v37 = vld [vmem:[%s1 + $0x78] sm:$0xff]
  %v38 = vld [vmem:[%s1 + $0x80] sm:$0xf]
  %v39 = vld [vmem:[%s1 + $0x84] sm:$0xff]
  %v40 = vld [vmem:[%s1 + $0x8c] sm:$0xf]
  %v41 = vld [vmem:[%s1 + $0x90] sm:$0xff]
  %v42 = vld [vmem:[%s1 + $0x98] sm:$0xf]
  %v43 = vld [vmem:[%s1 + $0x9c] sm:$0xff]
  %v44 = vld [vmem:[%s1 + $0xa4] sm:$0xf]
  %v45 = vld [vmem:[%s1 + $0xa8] sm:$0xff]
  %v46 = vld [vmem:[%s1 + $0xb0] sm:$0xf]
  %v47 = vld [vmem:[%s1 + $0xb4] sm:$0xff]
  %v48 = vld [vmem:[%s1 + $0xbc] sm:$0xf]
  %v49 = vld [vmem:[%s2] sm:$0x7]
  %v51 = vlaneseq
  %v52 = vshrl.u32 %v51, 7
  %v53 = vsub.s32 0, %v52
  %v54 = vrot.slane %v49, %v53
  %v55 = vlaneseq
  %v56 = vshrl.u32 %v55, 7
  %v57 = vsub.s32 1, %v56
  %v58 = vrot.slane %v49, %v57
  %v59 = vlaneseq
  %v60 = vshrl.u32 %v59, 7
  %v61 = vsub.s32 2, %v60
  %v62 = vrot.slane %v49, %v61
  %v68 = vunpack.c.l.b16 %v15
  %v69 = vunpack.c.l.b16 %v16
  %v70 = vpack.c.b16 %v69, %v68
  %v104 = vunpack.c.l.b16 %v17
  %v105 = vunpack.c.h.b16 %v17
  %v106 = vunpack.c.l.b16 %v18
  %v107 = vunpack.c.l.b16 %v19
  %v108 = vunpack.c.h.b16 %v19
  %v109 = vunpack.c.l.b16 %v20
  %v110 = vunpack.c.l.b16 %v21
  %v111 = vunpack.c.h.b16 %v21
  %v112 = vunpack.c.l.b16 %v22
  %v113 = vunpack.c.l.b16 %v23
  %v114 = vunpack.c.h.b16 %v23
  %v115 = vunpack.c.l.b16 %v24
  %v116 = vunpack.c.l.b16 %v25
  %v117 = vunpack.c.h.b16 %v25
  %v118 = vunpack.c.l.b16 %v26
  %v119 = vunpack.c.l.b16 %v27
  %v120 = vunpack.c.h.b16 %v27
  %v121 = vunpack.c.l.b16 %v28
  %v122 = vunpack.c.l.b16 %v29
  %v123 = vunpack.c.h.b16 %v29
  %v124 = vunpack.c.l.b16 %v30
  %v125 = vunpack.c.l.b16 %v31
  %v126 = vunpack.c.h.b16 %v31
  %v127 = vunpack.c.l.b16 %v32
  %v128 = vunpack.c.l.b16 %v33
  %v129 = vunpack.c.h.b16 %v33
  %v130 = vunpack.c.l.b16 %v34
  %v131 = vunpack.c.l.b16 %v35
  %v132 = vunpack.c.h.b16 %v35
  %v133 = vunpack.c.l.b16 %v36
  %v134 = vunpack.c.l.b16 %v37
  %v135 = vunpack.c.h.b16 %v37
  %v136 = vunpack.c.l.b16 %v38
  %v137 = vunpack.c.l.b16 %v39
  %v138 = vunpack.c.h.b16 %v39
  %v139 = vunpack.c.l.b16 %v40
  %v140 = vunpack.c.l.b16 %v41
  %v141 = vunpack.c.h.b16 %v41
  %v142 = vunpack.c.l.b16 %v42
  %v143 = vunpack.c.l.b16 %v43
  %v144 = vunpack.c.h.b16 %v43
  %v145 = vunpack.c.l.b16 %v44
  %v146 = vunpack.c.l.b16 %v45
  %v147 = vunpack.c.h.b16 %v45
  %v148 = vunpack.c.l.b16 %v46
  %v149 = vunpack.c.l.b16 %v47
  %v150 = vunpack.c.h.b16 %v47
  %v151 = vunpack.c.l.b16 %v48
  %v152 = vpack.c.b16 %v107, %v104
  %v153 = vpack.c.b16 %v108, %v105
  %v154 = vpack.c.b16 %v109, %v106
  %v155 = vpack.c.b16 %v113, %v110
  %v156 = vpack.c.b16 %v114, %v111
  %v157 = vpack.c.b16 %v115, %v112
  %v158 = vpack.c.b16 %v119, %v116
  %v159 = vpack.c.b16 %v120, %v117
  %v160 = vpack.c.b16 %v121, %v118
  %v161 = vpack.c.b16 %v125, %v122
  %v162 = vpack.c.b16 %v126, %v123
  %v163 = vpack.c.b16 %v127, %v124
  %v164 = vpack.c.b16 %v131, %v128
  %v165 = vpack.c.b16 %v132, %v129
  %v166 = vpack.c.b16 %v133, %v130
  %v167 = vpack.c.b16 %v137, %v134
  %v168 = vpack.c.b16 %v138, %v135
  %v169 = vpack.c.b16 %v139, %v136
  %v170 = vpack.c.b16 %v143, %v140
  %v171 = vpack.c.b16 %v144, %v141
  %v172 = vpack.c.b16 %v145, %v142
  %v173 = vpack.c.b16 %v149, %v146
  %v174 = vpack.c.b16 %v150, %v147
  %v175 = vpack.c.b16 %v151, %v148
  %200 = vmatprep.subr.bf16.mxu0 %v174
  %201 = vmatpush1.bf16.msra.mxu0 %v173
  %202 = vmatprep.subr.bf16.mxu0 %v171
  %203 = vmatpush1.bf16.msra.mxu0 %v170
  %204 = vmatprep.subr.bf16.mxu0 %v168
  %205 = vmatpush1.bf16.msra.mxu0 %v167
  %206 = vmatprep.subr.bf16.mxu0 %v165
  %207 = vmatpush1.bf16.msra.mxu0 %v164
  %208 = vmatprep.subr.bf16.mxu0 %v162
  %209 = vmatpush1.bf16.msra.mxu0 %v161
  %210 = vmatprep.subr.bf16.mxu0 %v159
  %211 = vmatpush1.bf16.msra.mxu0 %v158
  %212 = vmatprep.subr.bf16.mxu0 %v156
  %213 = vmatpush1.bf16.msra.mxu0 %v155
  %214 = vmatprep.subr.bf16.mxu0 %v153
  %215 = vmatpush1.bf16.msra.mxu0 %v152
  %216 = vmatprep.subr.bf16.mxu0 0
  %217 = vmatpush2.bf16.msra.mxu0 0
  %218 = vmatprep.subr.bf16.mxu0 0
  %219 = vmatpush2.bf16.msra.mxu0 0
  %220 = vmatprep.subr.bf16.mxu0 0
  %221 = vmatpush2.bf16.msra.mxu0 0
  %222 = vmatprep.subr.bf16.mxu0 0
  %223 = vmatpush2.bf16.msra.mxu0 0
  %224 = vmatprep.subr.bf16.mxu0 0
  %225 = vmatpush2.bf16.msra.mxu0 0
  %226 = vmatprep.subr.bf16.mxu0 0
  %227 = vmatpush2.bf16.msra.mxu0 0
  %228 = vmatprep.subr.bf16.mxu0 0
  %229 = vmatpush2.bf16.msra.mxu0 0
  %230 = vmatprep.subr.bf16.mxu0 0
  %231 = vmatpush2.bf16.msra.mxu0 0
  %232 = vmatprep.mubr.bf16.mxu0 0
  %233 = vmatmul.mubr.bf16.gmra.mxu0 %v70
  %v234 = vpop.f32.mrf.mxu0
  %v235 = vadd.f32 %v54, %v234
  %v236 = vpop.f32.mrf.mxu0
  %v237 = vadd.f32 %v58, %v236
  %v238 = vpop.f32.mrf.mxu0
  %v239 = vadd.f32 %v54, %v238
  %v240 = vpop.f32.mrf.mxu0
  %v241 = vadd.f32 %v58, %v240
  %242 = vdwg.mxu0
  %243 = vmatprep.subr.bf16.mxu0 0
  %244 = vmatpush1.bf16.msra.mxu0 %v175
  %245 = vmatprep.subr.bf16.mxu0 0
  %246 = vmatpush1.bf16.msra.mxu0 %v172
  %247 = vmatprep.subr.bf16.mxu0 0
  %248 = vmatpush1.bf16.msra.mxu0 %v169
  %249 = vmatprep.subr.bf16.mxu0 0
  %250 = vmatpush1.bf16.msra.mxu0 %v166
  %251 = vmatprep.subr.bf16.mxu0 0
  %252 = vmatpush1.bf16.msra.mxu0 %v163
  %253 = vmatprep.subr.bf16.mxu0 0
  %254 = vmatpush1.bf16.msra.mxu0 %v160
  %255 = vmatprep.subr.bf16.mxu0 0
  %256 = vmatpush1.bf16.msra.mxu0 %v157
  %257 = vmatprep.subr.bf16.mxu0 0
  %258 = vmatpush1.bf16.msra.mxu0 %v154
  %259 = vmatprep.subr.bf16.mxu0 0
  %260 = vmatpush2.bf16.msra.mxu0 0
  %261 = vmatprep.subr.bf16.mxu0 0
  %262 = vmatpush2.bf16.msra.mxu0 0
  %263 = vmatprep.subr.bf16.mxu0 0
  %264 = vmatpush2.bf16.msra.mxu0 0
  %265 = vmatprep.subr.bf16.mxu0 0
  %266 = vmatpush2.bf16.msra.mxu0 0
  %267 = vmatprep.subr.bf16.mxu0 0
  %268 = vmatpush2.bf16.msra.mxu0 0
  %269 = vmatprep.subr.bf16.mxu0 0
  %270 = vmatpush2.bf16.msra.mxu0 0
  %271 = vmatprep.subr.bf16.mxu0 0
  %272 = vmatpush2.bf16.msra.mxu0 0
  %273 = vmatprep.subr.bf16.mxu0 0
  %274 = vmatpush2.bf16.msra.mxu0 0
  %275 = vmatprep.mubr.bf16.mxu0 0
  %276 = vmatmul.mubr.bf16.gmra.mxu0 %v70
  %v277 = vpop.f32.mrf.mxu0
  %v278 = vadd.f32 %v62, %v277
  %v279 = vpop.f32.mrf.mxu0
  %v280 = vpop.f32.mrf.mxu0
  %v281 = vadd.f32 %v62, %v280
  %v282 = vpop.f32.mrf.mxu0
  %283 = vdwg.mxu0
  %v284 = vpack.c.bf16 %v239, %v235
  %v285 = vpack.c.bf16 %v241, %v237
  %v286 = vpack.c.bf16 %v281, %v278
  %v290 = vunpack.c.l.b16 %v284
  %v291 = vunpack.c.l.b16 %v285
  %v292 = vunpack.c.l.b16 %v286
  %v293 = vunpack.c.h.b16 %v284
  %v294 = vunpack.c.h.b16 %v285
  %v295 = vunpack.c.h.b16 %v286
  %v296 = vpack.c.b16 %v291, %v290
  %v297 = vpack.c.b16 %v292, %v292
  %v298 = vpack.c.b16 %v294, %v293
  %v299 = vpack.c.b16 %v295, %v295
  %304 = vst [vmem:[%s3] sm:$0xff] %v296
  %305 = vst [vmem:[%s3 + $0x8] sm:$0xf] %v297
  %306 = vst [vmem:[%s3 + $0xc] sm:$0xff] %v298
  %307 = vst [vmem:[%s3 + $0x14] sm:$0xf] %v299
  // Predicated region
  $region14: #{creation_rnn_forward.7} parent=0 // pred_check
    _
  $region15: #{creation_rnn_forward.7} parent=0 // pred_check_branch
    %309 = sbr.rel (0) target = $region17
  $region16: #{creation_rnn_forward.7} parent=0 // pred_region
    _
  $region17: #{creation_rnn_forward.7} parent=0 // pred_fallthru
    _
  // Predicated region
  $region18: #{creation_rnn_forward.7} parent=0 // pred_check
    _
  $region19: #{creation_rnn_forward.7} parent=0 // pred_check_branch
    %311 = sbr.rel (0) target = $region21
  $region20: #{creation_rnn_forward.7} parent=0 // pred_region
    _
  $region21: #{creation_rnn_forward.7} parent=0 // pred_fallthru
    _

// kernel: creation_rnn_forward.5
$region0: #{creation_rnn_forward.5}
  #allocation0 [shape = 'u32[]', space=smem, size = 0x4, offset = 0x4, fixed_abs, tag = 'smem constant byte address 0x4 - core index']
  #allocation1 [shape = 'u32[144,128]{1,0:T(1,128)}', space=vmem, size = 0x12000, scoped, tag = 'internal scratch']
  %s0 = inlined_call_operand.vmem [shape: f32[16,4], index: 0, kind: input, shape index: {}]
  %s1 = inlined_call_operand.vmem [shape: bf16[4,384], index: 1, kind: input, shape index: {}]
  %s2 = inlined_call_operand.vmem [shape: f32[1,384], index: 2, kind: input, shape index: {}]
  %s3 = inlined_call_operand.vmem [shape: bf16[16,384], index: 3, kind: output, shape index: {}]
  %s4 = sld [smem:[#allocation0]]
  $region22: #{creation_rnn_forward.5} parent=0
    _
  %s6 = ssub.s32 1, %s4
  %s7 = scalar_select 0, %s6, %s4
  // Predicated region
  $region2: #{creation_rnn_forward.5} parent=0 // pred_check
    _
  $region3: #{creation_rnn_forward.5} parent=0 // pred_check_branch
    %9 = sbr.rel (0) target = $region5
  $region4: #{creation_rnn_forward.5} parent=0 // pred_region
    _
  $region5: #{creation_rnn_forward.5} parent=0 // pred_fallthru
    _
  // Predicated region
  $region6: #{creation_rnn_forward.5} parent=0 // pred_check
    _
  $region7: #{creation_rnn_forward.5} parent=0 // pred_check_branch
    %11 = sbr.rel (0) target = $region9
  $region8: #{creation_rnn_forward.5} parent=0 // pred_region
    _
  $region9: #{creation_rnn_forward.5} parent=0 // pred_fallthru
    _
  // Predicated region
  $region10: #{creation_rnn_forward.5} parent=0 // pred_check
    _
  $region11: #{creation_rnn_forward.5} parent=0 // pred_check_branch
    %13 = sbr.rel (0) target = $region13
  $region12: #{creation_rnn_forward.5} parent=0 // pred_region
    _
  $region13: #{creation_rnn_forward.5} parent=0 // pred_fallthru
    _
  %v15 = vld [vmem:[%s0] sm:$0xff]
  %v16 = vld [vmem:[%s0 + $0x8] sm:$0xff]
  %v17 = vpack.c.bf16 %v16, %v15
  %v18 = vld [vmem:[%s1] sm:$0x3f]
  %v19 = vld [vmem:[%s2] sm:$0x7]
  %v21 = vlaneseq
  %v22 = vshrl.u32 %v21, 7
  %v23 = vsub.s32 0, %v22
  %v24 = vrot.slane %v19, %v23
  %v25 = vlaneseq
  %v26 = vshrl.u32 %v25, 7
  %v27 = vsub.s32 1, %v26
  %v28 = vrot.slane %v19, %v27
  %v29 = vlaneseq
  %v30 = vshrl.u32 %v29, 7
  %v31 = vsub.s32 2, %v30
  %v32 = vrot.slane %v19, %v31
  %v37 = vcombine.high %v18, %v18
  %v39 = vunpack.c.l.s4 1983009808
  %v40 = vunpack.c.0.s8 %v39
  %v41 = vlaneseq
  %v42 = vshrl.u32 %v41, 7
  %v43 = vsub.s32 %v40, %v42
  %v44 = vrot.slane %v18, %v43
  %v46 = vunpack.c.l.s4 1983009808
  %v47 = vunpack.c.0.s8 %v46
  %v48 = vlaneseq
  %v49 = vshrl.u32 %v48, 7
  %v50 = vsub.s32 %v47, %v49
  %v51 = vrot.slane %v37, %v50
  %v52 = vcombine.high %v44, %v44
  %vm53 = vcmask 31744
  %v55 = vsel %vm53, %v17, 0
  %vm57 = vcmask 1041408
  %v59 = vsel %vm57, %v44, 0
  %v62 = vsel %vm57, %v52, 0
  %v65 = vsel %vm57, %v51, 0
  %67 = vmatprep.subr.bf16.mxu0 0
  %68 = vmatpush1.bf16.msra.mxu0 0
  %69 = vmatprep.subr.bf16.mxu0 0
  %70 = vmatpush1.bf16.msra.mxu0 0
  %71 = vmatprep.subr.bf16.mxu0 0
  %72 = vmatpush1.bf16.msra.mxu0 0
  %73 = vmatprep.subr.bf16.mxu0 0
  %74 = vmatpush1.bf16.msra.mxu0 0
  %75 = vmatprep.subr.bf16.mxu0 0
  %76 = vmatpush1.bf16.msra.mxu0 0
  %77 = vmatprep.subr.bf16.mxu0 0
  %78 = vmatpush1.bf16.msra.mxu0 0
  %79 = vmatprep.subr.bf16.mxu0 0
  %80 = vmatpush1.bf16.msra.mxu0 0
  %81 = vmatprep.subr.bf16.mxu0 %v62
  %82 = vmatpush1.bf16.msra.mxu0 %v59
  %83 = vmatprep.subr.bf16.mxu0 0
  %84 = vmatpush2.bf16.msra.mxu0 0
  %85 = vmatprep.subr.bf16.mxu0 0
  %86 = vmatpush2.bf16.msra.mxu0 0
  %87 = vmatprep.subr.bf16.mxu0 0
  %88 = vmatpush2.bf16.msra.mxu0 0
  %89 = vmatprep.subr.bf16.mxu0 0
  %90 = vmatpush2.bf16.msra.mxu0 0
  %91 = vmatprep.subr.bf16.mxu0 0
  %92 = vmatpush2.bf16.msra.mxu0 0
  %93 = vmatprep.subr.bf16.mxu0 0
  %94 = vmatpush2.bf16.msra.mxu0 0
  %95 = vmatprep.subr.bf16.mxu0 0
  %96 = vmatpush2.bf16.msra.mxu0 0
  %97 = vmatprep.subr.bf16.mxu0 0
  %98 = vmatpush2.bf16.msra.mxu0 0
  %99 = vmatprep.mubr.bf16.mxu0 0
  %100 = vmatmul.mubr.bf16.gmra.mxu0 %v55
  %v101 = vpop.f32.mrf.mxu0
  %v102 = vadd.f32 %v24, %v101
  %v103 = vpop.f32.mrf.mxu0
  %v104 = vadd.f32 %v28, %v103
  %v105 = vpop.f32.mrf.mxu0
  %v106 = vadd.f32 %v24, %v105
  %v107 = vpop.f32.mrf.mxu0
  %v108 = vadd.f32 %v28, %v107
  %109 = vdwg.mxu0
  %110 = vmatprep.subr.bf16.mxu0 0
  %111 = vmatpush1.bf16.msra.mxu0 0
  %112 = vmatprep.subr.bf16.mxu0 0
  %113 = vmatpush1.bf16.msra.mxu0 0
  %114 = vmatprep.subr.bf16.mxu0 0
  %115 = vmatpush1.bf16.msra.mxu0 0
  %116 = vmatprep.subr.bf16.mxu0 0
  %117 = vmatpush1.bf16.msra.mxu0 0
  %118 = vmatprep.subr.bf16.mxu0 0
  %119 = vmatpush1.bf16.msra.mxu0 0
  %120 = vmatprep.subr.bf16.mxu0 0
  %121 = vmatpush1.bf16.msra.mxu0 0
  %122 = vmatprep.subr.bf16.mxu0 0
  %123 = vmatpush1.bf16.msra.mxu0 0
  %124 = vmatprep.subr.bf16.mxu0 0
  %125 = vmatpush1.bf16.msra.mxu0 %v65
  %126 = vmatprep.subr.bf16.mxu0 0
  %127 = vmatpush2.bf16.msra.mxu0 0
  %128 = vmatprep.subr.bf16.mxu0 0
  %129 = vmatpush2.bf16.msra.mxu0 0
  %130 = vmatprep.subr.bf16.mxu0 0
  %131 = vmatpush2.bf16.msra.mxu0 0
  %132 = vmatprep.subr.bf16.mxu0 0
  %133 = vmatpush2.bf16.msra.mxu0 0
  %134 = vmatprep.subr.bf16.mxu0 0
  %135 = vmatpush2.bf16.msra.mxu0 0
  %136 = vmatprep.subr.bf16.mxu0 0
  %137 = vmatpush2.bf16.msra.mxu0 0
  %138 = vmatprep.subr.bf16.mxu0 0
  %139 = vmatpush2.bf16.msra.mxu0 0
  %140 = vmatprep.subr.bf16.mxu0 0
  %141 = vmatpush2.bf16.msra.mxu0 0
  %142 = vmatprep.mubr.bf16.mxu0 0
  %143 = vmatmul.mubr.bf16.gmra.mxu0 %v55
  %v144 = vpop.f32.mrf.mxu0
  %v145 = vadd.f32 %v32, %v144
  %v146 = vpop.f32.mrf.mxu0
  %v147 = vpop.f32.mrf.mxu0
  %v148 = vadd.f32 %v32, %v147
  %v149 = vpop.f32.mrf.mxu0
  %150 = vdwg.mxu0
  %v151 = vpack.c.bf16 %v106, %v102
  %v152 = vpack.c.bf16 %v108, %v104
  %v153 = vpack.c.bf16 %v148, %v145
  %v157 = vunpack.c.l.b16 %v151
  %v158 = vunpack.c.l.b16 %v152
  %v159 = vunpack.c.l.b16 %v153
  %v160 = vunpack.c.h.b16 %v151
  %v161 = vunpack.c.h.b16 %v152
  %v162 = vunpack.c.h.b16 %v153
  %v163 = vpack.c.b16 %v158, %v157
  %v164 = vpack.c.b16 %v159, %v159
  %v165 = vpack.c.b16 %v161, %v160
  %v166 = vpack.c.b16 %v162, %v162
  %171 = vst [vmem:[%s3] sm:$0xff] %v163
  %172 = vst [vmem:[%s3 + $0x8] sm:$0xf] %v164
  %173 = vst [vmem:[%s3 + $0xc] sm:$0xff] %v165
  %174 = vst [vmem:[%s3 + $0x14] sm:$0xf] %v166
  // Predicated region
  $region14: #{creation_rnn_forward.5} parent=0 // pred_check
    _
  $region15: #{creation_rnn_forward.5} parent=0 // pred_check_branch
    %176 = sbr.rel (0) target = $region17
  $region16: #{creation_rnn_forward.5} parent=0 // pred_region
    _
  $region17: #{creation_rnn_forward.5} parent=0 // pred_fallthru
    _
  // Predicated region
  $region18: #{creation_rnn_forward.5} parent=0 // pred_check
    _
  $region19: #{creation_rnn_forward.5} parent=0 // pred_check_branch
    %178 = sbr.rel (0) target = $region21
  $region20: #{creation_rnn_forward.5} parent=0 // pred_region
    _
  $region21: #{creation_rnn_forward.5} parent=0 // pred_fallthru
    _

// kernel: creation_rnn_forward.9
$region0: #{creation_rnn_forward.9}
  #allocation0 [shape = 'u32[]', space=smem, size = 0x4, offset = 0x4, fixed_abs, tag = 'smem constant byte address 0x4 - core index']
  #allocation1 [shape = 'u32[144,128]{1,0:T(1,128)}', space=vmem, size = 0x12000, scoped, tag = 'internal scratch']
  %s0 = inlined_call_operand.vmem [shape: bf16[16,128], index: 0, kind: input, shape index: {}]
  %s1 = inlined_call_operand.vmem [shape: bf16[128,128], index: 1, kind: input, shape index: {}]
  %s2 = inlined_call_operand.vmem [shape: f32[1,128], index: 2, kind: input, shape index: {}]
  %s3 = inlined_call_operand.vmem [shape: f32[16,128], index: 3, kind: output, shape index: {}]
  %s4 = sld [smem:[#allocation0]]
  $region22: #{creation_rnn_forward.9} parent=0
    _
  %s6 = ssub.s32 1, %s4
  %s7 = scalar_select 0, %s6, %s4
  // Predicated region
  $region2: #{creation_rnn_forward.9} parent=0 // pred_check
    _
  $region3: #{creation_rnn_forward.9} parent=0 // pred_check_branch
    %9 = sbr.rel (0) target = $region5
  $region4: #{creation_rnn_forward.9} parent=0 // pred_region
    _
  $region5: #{creation_rnn_forward.9} parent=0 // pred_fallthru
    _
  // Predicated region
  $region6: #{creation_rnn_forward.9} parent=0 // pred_check
    _
  $region7: #{creation_rnn_forward.9} parent=0 // pred_check_branch
    %11 = sbr.rel (0) target = $region9
  $region8: #{creation_rnn_forward.9} parent=0 // pred_region
    _
  $region9: #{creation_rnn_forward.9} parent=0 // pred_fallthru
    _
  // Predicated region
  $region10: #{creation_rnn_forward.9} parent=0 // pred_check
    _
  $region11: #{creation_rnn_forward.9} parent=0 // pred_check_branch
    %13 = sbr.rel (0) target = $region13
  $region12: #{creation_rnn_forward.9} parent=0 // pred_region
    _
  $region13: #{creation_rnn_forward.9} parent=0 // pred_fallthru
    _
  %v15 = vld [vmem:[%s0] sm:$0xf]
  %v16 = vld [vmem:[%s0 + $0x4] sm:$0xf]
  %v17 = vld [vmem:[%s1] sm:$0xf]
  %v18 = vld [vmem:[%s1 + $0x4] sm:$0xf]
  %v19 = vld [vmem:[%s1 + $0x8] sm:$0xf]
  %v20 = vld [vmem:[%s1 + $0xc] sm:$0xf]
  %v21 = vld [vmem:[%s1 + $0x10] sm:$0xf]
  %v22 = vld [vmem:[%s1 + $0x14] sm:$0xf]
  %v23 = vld [vmem:[%s1 + $0x18] sm:$0xf]
  %v24 = vld [vmem:[%s1 + $0x1c] sm:$0xf]
  %v25 = vld [vmem:[%s1 + $0x20] sm:$0xf]
  %v26 = vld [vmem:[%s1 + $0x24] sm:$0xf]
  %v27 = vld [vmem:[%s1 + $0x28] sm:$0xf]
  %v28 = vld [vmem:[%s1 + $0x2c] sm:$0xf]
  %v29 = vld [vmem:[%s1 + $0x30] sm:$0xf]
  %v30 = vld [vmem:[%s1 + $0x34] sm:$0xf]
  %v31 = vld [vmem:[%s1 + $0x38] sm:$0xf]
  %v32 = vld [vmem:[%s1 + $0x3c] sm:$0xf]
  %v33 = vld [vmem:[%s2] sm:$0x1]
  %v35 = vlaneseq
  %v36 = vshrl.u32 %v35, 7
  %v37 = vsub.s32 0, %v36
  %v38 = vrot.slane %v33, %v37
  %v42 = vunpack.c.l.b16 %v15
  %v43 = vunpack.c.l.b16 %v16
  %v44 = vpack.c.b16 %v43, %v42
  %v62 = vunpack.c.l.b16 %v17
  %v63 = vunpack.c.l.b16 %v18
  %v64 = vunpack.c.l.b16 %v19
  %v65 = vunpack.c.l.b16 %v20
  %v66 = vunpack.c.l.b16 %v21
  %v67 = vunpack.c.l.b16 %v22
  %v68 = vunpack.c.l.b16 %v23
  %v69 = vunpack.c.l.b16 %v24
  %v70 = vunpack.c.l.b16 %v25
  %v71 = vunpack.c.l.b16 %v26
  %v72 = vunpack.c.l.b16 %v27
  %v73 = vunpack.c.l.b16 %v28
  %v74 = vunpack.c.l.b16 %v29
  %v75 = vunpack.c.l.b16 %v30
  %v76 = vunpack.c.l.b16 %v31
  %v77 = vunpack.c.l.b16 %v32
  %v78 = vpack.c.b16 %v63, %v62
  %v79 = vpack.c.b16 %v65, %v64
  %v80 = vpack.c.b16 %v67, %v66
  %v81 = vpack.c.b16 %v69, %v68
  %v82 = vpack.c.b16 %v71, %v70
  %v83 = vpack.c.b16 %v73, %v72
  %v84 = vpack.c.b16 %v75, %v74
  %v85 = vpack.c.b16 %v77, %v76
  %94 = vmatprep.subr.bf16.mxu0 0
  %95 = vmatpush1.bf16.msra.mxu0 %v85
  %96 = vmatprep.subr.bf16.mxu0 0
  %97 = vmatpush1.bf16.msra.mxu0 %v84
  %98 = vmatprep.subr.bf16.mxu0 0
  %99 = vmatpush1.bf16.msra.mxu0 %v83
  %100 = vmatprep.subr.bf16.mxu0 0
  %101 = vmatpush1.bf16.msra.mxu0 %v82
  %102 = vmatprep.subr.bf16.mxu0 0
  %103 = vmatpush1.bf16.msra.mxu0 %v81
  %104 = vmatprep.subr.bf16.mxu0 0
  %105 = vmatpush1.bf16.msra.mxu0 %v80
  %106 = vmatprep.subr.bf16.mxu0 0
  %107 = vmatpush1.bf16.msra.mxu0 %v79
  %108 = vmatprep.subr.bf16.mxu0 0
  %109 = vmatpush1.bf16.msra.mxu0 %v78
  %110 = vmatprep.subr.bf16.mxu0 0
  %111 = vmatpush2.bf16.msra.mxu0 0
  %112 = vmatprep.subr.bf16.mxu0 0
  %113 = vmatpush2.bf16.msra.mxu0 0
  %114 = vmatprep.subr.bf16.mxu0 0
  %115 = vmatpush2.bf16.msra.mxu0 0
  %116 = vmatprep.subr.bf16.mxu0 0
  %117 = vmatpush2.bf16.msra.mxu0 0
  %118 = vmatprep.subr.bf16.mxu0 0
  %119 = vmatpush2.bf16.msra.mxu0 0
  %120 = vmatprep.subr.bf16.mxu0 0
  %121 = vmatpush2.bf16.msra.mxu0 0
  %122 = vmatprep.subr.bf16.mxu0 0
  %123 = vmatpush2.bf16.msra.mxu0 0
  %124 = vmatprep.subr.bf16.mxu0 0
  %125 = vmatpush2.bf16.msra.mxu0 0
  %126 = vmatprep.mubr.bf16.mxu0 0
  %127 = vmatmul.mubr.bf16.gmra.mxu0 %v44
  %v128 = vpop.f32.mrf.mxu0
  %v129 = vadd.f32 %v38, %v128
  %v130 = vpop.f32.mrf.mxu0
  %v131 = vpop.f32.mrf.mxu0
  %v132 = vadd.f32 %v38, %v131
  %v133 = vpop.f32.mrf.mxu0
  %134 = vdwg.mxu0
  %135 = vst [vmem:[%s3] sm:$0xff] %v129
  %136 = vst [vmem:[%s3 + $0x8] sm:$0xff] %v132
  // Predicated region
  $region14: #{creation_rnn_forward.9} parent=0 // pred_check
    _
  $region15: #{creation_rnn_forward.9} parent=0 // pred_check_branch
    %138 = sbr.rel (0) target = $region17
  $region16: #{creation_rnn_forward.9} parent=0 // pred_region
    _
  $region17: #{creation_rnn_forward.9} parent=0 // pred_fallthru
    _
  // Predicated region
  $region18: #{creation_rnn_forward.9} parent=0 // pred_check
    _
  $region19: #{creation_rnn_forward.9} parent=0 // pred_check_branch
    %140 = sbr.rel (0) target = $region21
  $region20: #{creation_rnn_forward.9} parent=0 // pred_region
    _
  $region21: #{creation_rnn_forward.9} parent=0 // pred_fallthru
    _

// kernel: creation_rnn_forward.6
$region0: #{creation_rnn_forward.6}
  #allocation0 [shape = 'u32[]', space=smem, size = 0x4, offset = 0x4, fixed_abs, tag = 'smem constant byte address 0x4 - core index']
  #allocation1 [shape = 'u32[144,128]{1,0:T(1,128)}', space=vmem, size = 0x12000, scoped, tag = 'internal scratch']
  #allocation2 [shape = 'f32[2,128]{1,0:T(2,128)}', space=vmem, size = 0x400, scoped, tag = 'scratch operand']
  %s0 = inlined_call_operand.vmem [shape: bf16[8,2,384], index: 0, kind: input, shape index: {}]
  %s1 = inlined_call_operand.vmem [shape: f32[2,128], index: 1, kind: input, shape index: {}]
  %s2 = inlined_call_operand.vmem [shape: bf16[128,384], index: 2, kind: input, shape index: {}]
  %s3 = inlined_call_operand.vmem [shape: f32[1,128], index: 3, kind: input, shape index: {}]
  %s4 = inlined_call_operand.vmem [shape: bf16[8,2,128], index: 4, kind: output, shape index: {0}]
  %s5 = inlined_call_operand.vmem [shape: f32[2,128], index: 5, kind: output, shape index: {1}]
  %6 = xla_tuple %s4, %s5
  %s7 = sld [smem:[#allocation0]]
  $region42: #{creation_rnn_forward.6} parent=0
    _
  %s9 = ssub.s32 1, %s7
  %s10 = scalar_select 0, %s9, %s7
  // Predicated region
  $region2: #{creation_rnn_forward.6} parent=0 // pred_check
    _
  $region3: #{creation_rnn_forward.6} parent=0 // pred_check_branch
    %12 = sbr.rel (0) target = $region5
  $region4: #{creation_rnn_forward.6} parent=0 // pred_region
    _
  $region5: #{creation_rnn_forward.6} parent=0 // pred_fallthru
    _
  // Predicated region
  $region6: #{creation_rnn_forward.6} parent=0 // pred_check
    _
  $region7: #{creation_rnn_forward.6} parent=0 // pred_check_branch
    %14 = sbr.rel (0) target = $region9
  $region8: #{creation_rnn_forward.6} parent=0 // pred_region
    _
  $region9: #{creation_rnn_forward.6} parent=0 // pred_fallthru
    _
  // Predicated region
  $region10: #{creation_rnn_forward.6} parent=0 // pred_check
    _
  $region11: #{creation_rnn_forward.6} parent=0 // pred_check_branch
    %16 = sbr.rel (0) target = $region13
  $region12: #{creation_rnn_forward.6} parent=0 // pred_region
    _
  $region13: #{creation_rnn_forward.6} parent=0 // pred_fallthru
    _
  // Predicated region
  $region14: #{creation_rnn_forward.6} parent=0 // pred_check
    _
  $region15: #{creation_rnn_forward.6} parent=0 // pred_check_branch
    %18 = sbr.rel (0) target = $region17
  $region16: #{creation_rnn_forward.6} parent=0 // pred_region
    _
  $region17: #{creation_rnn_forward.6} parent=0 // pred_fallthru
    _
  %p20 = scmp.eq.s32.totalorder 0, 0
  // Predicated region
  $region18: #{creation_rnn_forward.6} parent=0 // pred_check
    %p21 = pneg %p20
  $region19: #{creation_rnn_forward.6} parent=0 // pred_check_branch
    %23 = sbr.rel (%p21) target = $region21
  $region20: #{creation_rnn_forward.6} parent=0 // pred_region
    %v24 = vld [vmem:[%s1] sm:$0x3]
    %25 = vst [vmem:[#allocation2] sm:$0x3] %v24
  $region21: #{creation_rnn_forward.6} parent=0 // pred_fallthru
    _
  %v26 = vld [vmem:[%s2] sm:$0xff]
  %v27 = vld [vmem:[%s2 + $0x8] sm:$0xf]
  %v28 = vld [vmem:[%s2 + $0xc] sm:$0xff]
  %v29 = vld [vmem:[%s2 + $0x14] sm:$0xf]
  %v30 = vld [vmem:[%s2 + $0x18] sm:$0xff]
  %v31 = vld [vmem:[%s2 + $0x20] sm:$0xf]
  %v32 = vld [vmem:[%s2 + $0x24] sm:$0xff]
  %v33 = vld [vmem:[%s2 + $0x2c] sm:$0xf]
  %v34 = vld [vmem:[%s2 + $0x30] sm:$0xff]
  %v35 = vld [vmem:[%s2 + $0x38] sm:$0xf]
  %v36 = vld [vmem:[%s2 + $0x3c] sm:$0xff]
  %v37 = vld [vmem:[%s2 + $0x44] sm:$0xf]
  %v38 = vld [vmem:[%s2 + $0x48] sm:$0xff]
  %v39 = vld [vmem:[%s2 + $0x50] sm:$0xf]
  %v40 = vld [vmem:[%s2 + $0x54] sm:$0xff]
  %v41 = vld [vmem:[%s2 + $0x5c] sm:$0xf]
  %v42 = vld [vmem:[%s2 + $0x60] sm:$0xff]
  %v43 = vld [vmem:[%s2 + $0x68] sm:$0xf]
  %v44 = vld [vmem:[%s2 + $0x6c] sm:$0xff]
  %v45 = vld [vmem:[%s2 + $0x74] sm:$0xf]
  %v46 = vld [vmem:[%s2 + $0x78] sm:$0xff]
  %v47 = vld [vmem:[%s2 + $0x80] sm:$0xf]
  %v48 = vld [vmem:[%s2 + $0x84] sm:$0xff]
  %v49 = vld [vmem:[%s2 + $0x8c] sm:$0xf]
  %v50 = vld [vmem:[%s2 + $0x90] sm:$0xff]
  %v51 = vld [vmem:[%s2 + $0x98] sm:$0xf]
  %v52 = vld [vmem:[%s2 + $0x9c] sm:$0xff]
  %v53 = vld [vmem:[%s2 + $0xa4] sm:$0xf]
  %v54 = vld [vmem:[%s2 + $0xa8] sm:$0xff]
  %v55 = vld [vmem:[%s2 + $0xb0] sm:$0xf]
  %v56 = vld [vmem:[%s2 + $0xb4] sm:$0xff]
  %v57 = vld [vmem:[%s2 + $0xbc] sm:$0xf]
  %v58 = vld [vmem:[%s3] sm:$0x1]
  %v60 = vlaneseq
  %v61 = vshrl.u32 %v60, 7
  %v62 = vsub.s32 0, %v61
  %v63 = vrot.slane %v58, %v62
  %v65 = vld [vmem:[#allocation2] sm:$0x3]
  %v66 = vld [vmem:[%s0] sm:$0x7]
  %v67 = vunpack.c.l.bf16 %v66
  %v68 = vpack.c.bf16 %v65, %v65
  %v101 = vunpack.c.l.b16 %v26
  %v102 = vunpack.c.h.b16 %v26
  %v103 = vunpack.c.l.b16 %v27
  %v104 = vunpack.c.l.b16 %v28
  %v105 = vunpack.c.h.b16 %v28
  %v106 = vunpack.c.l.b16 %v29
  %v107 = vunpack.c.l.b16 %v30
  %v108 = vunpack.c.h.b16 %v30
  %v109 = vunpack.c.l.b16 %v31
  %v110 = vunpack.c.l.b16 %v32
  %v111 = vunpack.c.h.b16 %v32
  %v112 = vunpack.c.l.b16 %v33
  %v113 = vunpack.c.l.b16 %v34
  %v114 = vunpack.c.h.b16 %v34
  %v115 = vunpack.c.l.b16 %v35
  %v116 = vunpack.c.l.b16 %v36
  %v117 = vunpack.c.h.b16 %v36
  %v118 = vunpack.c.l.b16 %v37
  %v119 = vunpack.c.l.b16 %v38
  %v120 = vunpack.c.h.b16 %v38
  %v121 = vunpack.c.l.b16 %v39
  %v122 = vunpack.c.l.b16 %v40
  %v123 = vunpack.c.h.b16 %v40
  %v124 = vunpack.c.l.b16 %v41
  %v125 = vunpack.c.l.b16 %v42
  %v126 = vunpack.c.h.b16 %v42
  %v127 = vunpack.c.l.b16 %v43
  %v128 = vunpack.c.l.b16 %v44
  %v129 = vunpack.c.h.b16 %v44
  %v130 = vunpack.c.l.b16 %v45
  %v131 = vunpack.c.l.b16 %v46
  %v132 = vunpack.c.h.b16 %v46
  %v133 = vunpack.c.l.b16 %v47
  %v134 = vunpack.c.l.b16 %v48
  %v135 = vunpack.c.h.b16 %v48
  %v136 = vunpack.c.l.b16 %v49
  %v137 = vunpack.c.l.b16 %v50
  %v138 = vunpack.c.h.b16 %v50
  %v139 = vunpack.c.l.b16 %v51
  %v140 = vunpack.c.l.b16 %v52
  %v141 = vunpack.c.h.b16 %v52
  %v142 = vunpack.c.l.b16 %v53
  %v143 = vunpack.c.l.b16 %v54
  %v144 = vunpack.c.h.b16 %v54
  %v145 = vunpack.c.l.b16 %v55
  %v146 = vunpack.c.l.b16 %v56
  %v147 = vunpack.c.h.b16 %v56
  %v148 = vunpack.c.l.b16 %v57
  %v149 = vpack.c.b16 %v104, %v101
  %v150 = vpack.c.b16 %v105, %v102
  %v151 = vpack.c.b16 %v106, %v103
  %v152 = vpack.c.b16 %v110, %v107
  %v153 = vpack.c.b16 %v111, %v108
  %v154 = vpack.c.b16 %v112, %v109
  %v155 = vpack.c.b16 %v116, %v113
  %v156 = vpack.c.b16 %v117, %v114
  %v157 = vpack.c.b16 %v118, %v115
  %v158 = vpack.c.b16 %v122, %v119
  %v159 = vpack.c.b16 %v123, %v120
  %v160 = vpack.c.b16 %v124, %v121
  %v161 = vpack.c.b16 %v128, %v125
  %v162 = vpack.c.b16 %v129, %v126
  %v163 = vpack.c.b16 %v130, %v127
  %v164 = vpack.c.b16 %v134, %v131
  %v165 = vpack.c.b16 %v135, %v132
  %v166 = vpack.c.b16 %v136, %v133
  %v167 = vpack.c.b16 %v140, %v137
  %v168 = vpack.c.b16 %v141, %v138
  %v169 = vpack.c.b16 %v142, %v139
  %v170 = vpack.c.b16 %v146, %v143
  %v171 = vpack.c.b16 %v147, %v144
  %v172 = vpack.c.b16 %v148, %v145
  %197 = vmatprep.subr.bf16.mxu0 %v171
  %198 = vmatpush1.bf16.msra.mxu0 %v170
  %199 = vmatprep.subr.bf16.mxu0 %v168
  %200 = vmatpush1.bf16.msra.mxu0 %v167
  %201 = vmatprep.subr.bf16.mxu0 %v165
  %202 = vmatpush1.bf16.msra.mxu0 %v164
  %203 = vmatprep.subr.bf16.mxu0 %v162
  %204 = vmatpush1.bf16.msra.mxu0 %v161
  %205 = vmatprep.subr.bf16.mxu0 %v159
  %206 = vmatpush1.bf16.msra.mxu0 %v158
  %207 = vmatprep.subr.bf16.mxu0 %v156
  %208 = vmatpush1.bf16.msra.mxu0 %v155
  %209 = vmatprep.subr.bf16.mxu0 %v153
  %210 = vmatpush1.bf16.msra.mxu0 %v152
  %211 = vmatprep.subr.bf16.mxu0 %v150
  %212 = vmatpush1.bf16.msra.mxu0 %v149
  %213 = vmatprep.subr.bf16.mxu0 0
  %214 = vmatpush2.bf16.msra.mxu0 0
  %215 = vmatprep.subr.bf16.mxu0 0
  %216 = vmatpush2.bf16.msra.mxu0 0
  %217 = vmatprep.subr.bf16.mxu0 0
  %218 = vmatpush2.bf16.msra.mxu0 0
  %219 = vmatprep.subr.bf16.mxu0 0
  %220 = vmatpush2.bf16.msra.mxu0 0
  %221 = vmatprep.subr.bf16.mxu0 0
  %222 = vmatpush2.bf16.msra.mxu0 0
  %223 = vmatprep.subr.bf16.mxu0 0
  %224 = vmatpush2.bf16.msra.mxu0 0
  %225 = vmatprep.subr.bf16.mxu0 0
  %226 = vmatpush2.bf16.msra.mxu0 0
  %227 = vmatprep.subr.bf16.mxu0 0
  %228 = vmatpush2.bf16.msra.mxu0 0
  %229 = vmatprep.mubr.bf16.mxu0 0
  %230 = vmatmul.mubr.bf16.gmra.mxu0 %v68
  %v231 = vpop.f32.mrf.mxu0
  %v232 = vadd.f32 0.0, %v231
  %v233 = vpop.f32.mrf.mxu0
  %v234 = vadd.f32 0.0, %v233
  %v235 = vpop.f32.mrf.mxu0
  %v236 = vpop.f32.mrf.mxu0
  %237 = vdwg.mxu0
  %238 = vmatprep.subr.bf16.mxu0 0
  %239 = vmatpush1.bf16.msra.mxu0 %v172
  %240 = vmatprep.subr.bf16.mxu0 0
  %241 = vmatpush1.bf16.msra.mxu0 %v169
  %242 = vmatprep.subr.bf16.mxu0 0
  %243 = vmatpush1.bf16.msra.mxu0 %v166
  %244 = vmatprep.subr.bf16.mxu0 0
  %245 = vmatpush1.bf16.msra.mxu0 %v163
  %246 = vmatprep.subr.bf16.mxu0 0
  %247 = vmatpush1.bf16.msra.mxu0 %v160
  %248 = vmatprep.subr.bf16.mxu0 0
  %249 = vmatpush1.bf16.msra.mxu0 %v157
  %250 = vmatprep.subr.bf16.mxu0 0
  %251 = vmatpush1.bf16.msra.mxu0 %v154
  %252 = vmatprep.subr.bf16.mxu0 0
  %253 = vmatpush1.bf16.msra.mxu0 %v151
  %254 = vmatprep.subr.bf16.mxu0 0
  %255 = vmatpush2.bf16.msra.mxu0 0
  %256 = vmatprep.subr.bf16.mxu0 0
  %257 = vmatpush2.bf16.msra.mxu0 0
  %258 = vmatprep.subr.bf16.mxu0 0
  %259 = vmatpush2.bf16.msra.mxu0 0
  %260 = vmatprep.subr.bf16.mxu0 0
  %261 = vmatpush2.bf16.msra.mxu0 0
  %262 = vmatprep.subr.bf16.mxu0 0
  %263 = vmatpush2.bf16.msra.mxu0 0
  %264 = vmatprep.subr.bf16.mxu0 0
  %265 = vmatpush2.bf16.msra.mxu0 0
  %266 = vmatprep.subr.bf16.mxu0 0
  %267 = vmatpush2.bf16.msra.mxu0 0
  %268 = vmatprep.subr.bf16.mxu0 0
  %269 = vmatpush2.bf16.msra.mxu0 0
  %270 = vmatprep.mubr.bf16.mxu0 0
  %271 = vmatmul.mubr.bf16.gmra.mxu0 %v68
  %v272 = vpop.f32.mrf.mxu0
  %v273 = vadd.f32 0.0, %v272
  %v274 = vpop.f32.mrf.mxu0
  %v275 = vpop.f32.mrf.mxu0
  %v276 = vpop.f32.mrf.mxu0
  %277 = vdwg.mxu0
  %v278 = vadd.f32 %v67, %v232
  %v279 = vxor.u32 %v278, 2147483648
  %v280 = vmul.f32 %v279, 1.442695
  %v281 = vpow.pop %v280
  %v282 = vadd.f32 %v281, 1.0
  %v283 = vrcp.pop %v282
  %v284 = vmul.f32 1.0, %v283
  %v286 = vrot.slane %v67, 2
  %v288 = vadd.f32 %v286, %v234
  %v289 = vxor.u32 %v288, 2147483648
  %v290 = vmul.f32 %v289, 1.442695
  %v291 = vpow.pop %v290
  %v292 = vadd.f32 %v291, 1.0
  %v293 = vrcp.pop %v292
  %v294 = vmul.f32 1.0, %v293
  %v295 = vadd.f32 %v273, %v63
  %v296 = vmul.f32 %v284, %v295
  %v297 = vrot.slane %v67, 4
  %v299 = vadd.f32 %v297, %v296
  %v300 = vtanh.pop %v299
  %v301 = vsub.f32 1.0, %v294
  %v302 = vmul.f32 %v301, %v300
  %v303 = vmul.f32 %v294, %v65
  %v304 = vadd.f32 %v302, %v303
  %v305 = vpack.c.bf16 %v304, %v304
  %306 = vst [vmem:[%s4] sm:$0x1] %v305
  %s307 = scalar_lea.vmem %s0, 3
  %v308 = vld [vmem:[%s307] sm:$0x7]
  %v309 = vunpack.c.l.bf16 %v308
  %310 = vmatprep.subr.bf16.mxu0 %v171
  %311 = vmatpush1.bf16.msra.mxu0 %v170
  %312 = vmatprep.subr.bf16.mxu0 %v168
  %313 = vmatpush1.bf16.msra.mxu0 %v167
  %314 = vmatprep.subr.bf16.mxu0 %v165
  %315 = vmatpush1.bf16.msra.mxu0 %v164
  %316 = vmatprep.subr.bf16.mxu0 %v162
  %317 = vmatpush1.bf16.msra.mxu0 %v161
  %318 = vmatprep.subr.bf16.mxu0 %v159
  %319 = vmatpush1.bf16.msra.mxu0 %v158
  %320 = vmatprep.subr.bf16.mxu0 %v156
  %321 = vmatpush1.bf16.msra.mxu0 %v155
  %322 = vmatprep.subr.bf16.mxu0 %v153
  %323 = vmatpush1.bf16.msra.mxu0 %v152
  %324 = vmatprep.subr.bf16.mxu0 %v150
  %325 = vmatpush1.bf16.msra.mxu0 %v149
  %326 = vmatprep.subr.bf16.mxu0 0
  %327 = vmatpush2.bf16.msra.mxu0 0
  %328 = vmatprep.subr.bf16.mxu0 0
  %329 = vmatpush2.bf16.msra.mxu0 0
  %330 = vmatprep.subr.bf16.mxu0 0
  %331 = vmatpush2.bf16.msra.mxu0 0
  %332 = vmatprep.subr.bf16.mxu0 0
  %333 = vmatpush2.bf16.msra.mxu0 0
  %334 = vmatprep.subr.bf16.mxu0 0
  %335 = vmatpush2.bf16.msra.mxu0 0
  %336 = vmatprep.subr.bf16.mxu0 0
  %337 = vmatpush2.bf16.msra.mxu0 0
  %338 = vmatprep.subr.bf16.mxu0 0
  %339 = vmatpush2.bf16.msra.mxu0 0
  %340 = vmatprep.subr.bf16.mxu0 0
  %341 = vmatpush2.bf16.msra.mxu0 0
  %342 = vmatprep.mubr.bf16.mxu0 0
  %343 = vmatmul.mubr.bf16.gmra.mxu0 %v305
  %v344 = vpop.f32.mrf.mxu0
  %v345 = vadd.f32 0.0, %v344
  %v346 = vpop.f32.mrf.mxu0
  %v347 = vadd.f32 0.0, %v346
  %v348 = vpop.f32.mrf.mxu0
  %v349 = vpop.f32.mrf.mxu0
  %350 = vdwg.mxu0
  %351 = vmatprep.subr.bf16.mxu0 0
  %352 = vmatpush1.bf16.msra.mxu0 %v172
  %353 = vmatprep.subr.bf16.mxu0 0
  %354 = vmatpush1.bf16.msra.mxu0 %v169
  %355 = vmatprep.subr.bf16.mxu0 0
  %356 = vmatpush1.bf16.msra.mxu0 %v166
  %357 = vmatprep.subr.bf16.mxu0 0
  %358 = vmatpush1.bf16.msra.mxu0 %v163
  %359 = vmatprep.subr.bf16.mxu0 0
  %360 = vmatpush1.bf16.msra.mxu0 %v160
  %361 = vmatprep.subr.bf16.mxu0 0
  %362 = vmatpush1.bf16.msra.mxu0 %v157
  %363 = vmatprep.subr.bf16.mxu0 0
  %364 = vmatpush1.bf16.msra.mxu0 %v154
  %365 = vmatprep.subr.bf16.mxu0 0
  %366 = vmatpush1.bf16.msra.mxu0 %v151
  %367 = vmatprep.subr.bf16.mxu0 0
  %368 = vmatpush2.bf16.msra.mxu0 0
  %369 = vmatprep.subr.bf16.mxu0 0
  %370 = vmatpush2.bf16.msra.mxu0 0
  %371 = vmatprep.subr.bf16.mxu0 0
  %372 = vmatpush2.bf16.msra.mxu0 0
  %373 = vmatprep.subr.bf16.mxu0 0
  %374 = vmatpush2.bf16.msra.mxu0 0
  %375 = vmatprep.subr.bf16.mxu0 0
  %376 = vmatpush2.bf16.msra.mxu0 0
  %377 = vmatprep.subr.bf16.mxu0 0
  %378 = vmatpush2.bf16.msra.mxu0 0
  %379 = vmatprep.subr.bf16.mxu0 0
  %380 = vmatpush2.bf16.msra.mxu0 0
  %381 = vmatprep.subr.bf16.mxu0 0
  %382 = vmatpush2.bf16.msra.mxu0 0
  %383 = vmatprep.mubr.bf16.mxu0 0
  %384 = vmatmul.mubr.bf16.gmra.mxu0 %v305
  %v385 = vpop.f32.mrf.mxu0
  %v386 = vadd.f32 0.0, %v385
  %v387 = vpop.f32.mrf.mxu0
  %v388 = vpop.f32.mrf.mxu0
  %v389 = vpop.f32.mrf.mxu0
  %390 = vdwg.mxu0
  %v391 = vadd.f32 %v309, %v345
  %v392 = vxor.u32 %v391, 2147483648
  %v393 = vmul.f32 %v392, 1.442695
  %v394 = vpow.pop %v393
  %v395 = vadd.f32 %v394, 1.0
  %v396 = vrcp.pop %v395
  %v397 = vmul.f32 1.0, %v396
  %v399 = vrot.slane %v309, 2
  %v401 = vadd.f32 %v399, %v347
  %v402 = vxor.u32 %v401, 2147483648
  %v403 = vmul.f32 %v402, 1.442695
  %v404 = vpow.pop %v403
  %v405 = vadd.f32 %v404, 1.0
  %v406 = vrcp.pop %v405
  %v407 = vmul.f32 1.0, %v406
  %v408 = vadd.f32 %v386, %v63
  %v409 = vmul.f32 %v397, %v408
  %v410 = vrot.slane %v309, 4
  %v412 = vadd.f32 %v410, %v409
  %v413 = vtanh.pop %v412
  %v414 = vsub.f32 1.0, %v407
  %v415 = vmul.f32 %v414, %v413
  %v416 = vmul.f32 %v407, %v304
  %v417 = vadd.f32 %v415, %v416
  %v418 = vpack.c.bf16 %v417, %v417
  %s419 = scalar_lea.vmem %s4, 1
  %420 = vst [vmem:[%s419] sm:$0x1] %v418
  %s421 = scalar_lea.vmem %s0, 6
  %v422 = vld [vmem:[%s421] sm:$0x7]
  %v423 = vunpack.c.l.bf16 %v422
  %424 = vmatprep.subr.bf16.mxu0 %v171
  %425 = vmatpush1.bf16.msra.mxu0 %v170
  %426 = vmatprep.subr.bf16.mxu0 %v168
  %427 = vmatpush1.bf16.msra.mxu0 %v167
  %428 = vmatprep.subr.bf16.mxu0 %v165
  %429 = vmatpush1.bf16.msra.mxu0 %v164
  %430 = vmatprep.subr.bf16.mxu0 %v162
  %431 = vmatpush1.bf16.msra.mxu0 %v161
  %432 = vmatprep.subr.bf16.mxu0 %v159
  %433 = vmatpush1.bf16.msra.mxu0 %v158
  %434 = vmatprep.subr.bf16.mxu0 %v156
  %435 = vmatpush1.bf16.msra.mxu0 %v155
  %436 = vmatprep.subr.bf16.mxu0 %v153
  %437 = vmatpush1.bf16.msra.mxu0 %v152
  %438 = vmatprep.subr.bf16.mxu0 %v150
  %439 = vmatpush1.bf16.msra.mxu0 %v149
  %440 = vmatprep.subr.bf16.mxu0 0
  %441 = vmatpush2.bf16.msra.mxu0 0
  %442 = vmatprep.subr.bf16.mxu0 0
  %443 = vmatpush2.bf16.msra.mxu0 0
  %444 = vmatprep.subr.bf16.mxu0 0
  %445 = vmatpush2.bf16.msra.mxu0 0
  %446 = vmatprep.subr.bf16.mxu0 0
  %447 = vmatpush2.bf16.msra.mxu0 0
  %448 = vmatprep.subr.bf16.mxu0 0
  %449 = vmatpush2.bf16.msra.mxu0 0
  %450 = vmatprep.subr.bf16.mxu0 0
  %451 = vmatpush2.bf16.msra.mxu0 0
  %452 = vmatprep.subr.bf16.mxu0 0
  %453 = vmatpush2.bf16.msra.mxu0 0
  %454 = vmatprep.subr.bf16.mxu0 0
  %455 = vmatpush2.bf16.msra.mxu0 0
  %456 = vmatprep.mubr.bf16.mxu0 0
  %457 = vmatmul.mubr.bf16.gmra.mxu0 %v418
  %v458 = vpop.f32.mrf.mxu0
  %v459 = vadd.f32 0.0, %v458
  %v460 = vpop.f32.mrf.mxu0
  %v461 = vadd.f32 0.0, %v460
  %v462 = vpop.f32.mrf.mxu0
  %v463 = vpop.f32.mrf.mxu0
  %464 = vdwg.mxu0
  %465 = vmatprep.subr.bf16.mxu0 0
  %466 = vmatpush1.bf16.msra.mxu0 %v172
  %467 = vmatprep.subr.bf16.mxu0 0
  %468 = vmatpush1.bf16.msra.mxu0 %v169
  %469 = vmatprep.subr.bf16.mxu0 0
  %470 = vmatpush1.bf16.msra.mxu0 %v166
  %471 = vmatprep.subr.bf16.mxu0 0
  %472 = vmatpush1.bf16.msra.mxu0 %v163
  %473 = vmatprep.subr.bf16.mxu0 0
  %474 = vmatpush1.bf16.msra.mxu0 %v160
  %475 = vmatprep.subr.bf16.mxu0 0
  %476 = vmatpush1.bf16.msra.mxu0 %v157
  %477 = vmatprep.subr.bf16.mxu0 0
  %478 = vmatpush1.bf16.msra.mxu0 %v154
  %479 = vmatprep.subr.bf16.mxu0 0
  %480 = vmatpush1.bf16.msra.mxu0 %v151
  %481 = vmatprep.subr.bf16.mxu0 0
  %482 = vmatpush2.bf16.msra.mxu0 0
  %483 = vmatprep.subr.bf16.mxu0 0
  %484 = vmatpush2.bf16.msra.mxu0 0
  %485 = vmatprep.subr.bf16.mxu0 0
  %486 = vmatpush2.bf16.msra.mxu0 0
  %487 = vmatprep.subr.bf16.mxu0 0
  %488 = vmatpush2.bf16.msra.mxu0 0
  %489 = vmatprep.subr.bf16.mxu0 0
  %490 = vmatpush2.bf16.msra.mxu0 0
  %491 = vmatprep.subr.bf16.mxu0 0
  %492 = vmatpush2.bf16.msra.mxu0 0
  %493 = vmatprep.subr.bf16.mxu0 0
  %494 = vmatpush2.bf16.msra.mxu0 0
  %495 = vmatprep.subr.bf16.mxu0 0
  %496 = vmatpush2.bf16.msra.mxu0 0
  %497 = vmatprep.mubr.bf16.mxu0 0
  %498 = vmatmul.mubr.bf16.gmra.mxu0 %v418
  %v499 = vpop.f32.mrf.mxu0
  %v500 = vadd.f32 0.0, %v499
  %v501 = vpop.f32.mrf.mxu0
  %v502 = vpop.f32.mrf.mxu0
  %v503 = vpop.f32.mrf.mxu0
  %504 = vdwg.mxu0
  %v505 = vadd.f32 %v423, %v459
  %v506 = vxor.u32 %v505, 2147483648
  %v507 = vmul.f32 %v506, 1.442695
  %v508 = vpow.pop %v507
  %v509 = vadd.f32 %v508, 1.0
  %v510 = vrcp.pop %v509
  %v511 = vmul.f32 1.0, %v510
  %v513 = vrot.slane %v423, 2
  %v515 = vadd.f32 %v513, %v461
  %v516 = vxor.u32 %v515, 2147483648
  %v517 = vmul.f32 %v516, 1.442695
  %v518 = vpow.pop %v517
  %v519 = vadd.f32 %v518, 1.0
  %v520 = vrcp.pop %v519
  %v521 = vmul.f32 1.0, %v520
  %v522 = vadd.f32 %v500, %v63
  %v523 = vmul.f32 %v511, %v522
  %v524 = vrot.slane %v423, 4
  %v526 = vadd.f32 %v524, %v523
  %v527 = vtanh.pop %v526
  %v528 = vsub.f32 1.0, %v521
  %v529 = vmul.f32 %v528, %v527
  %v530 = vmul.f32 %v521, %v417
  %v531 = vadd.f32 %v529, %v530
  %v532 = vpack.c.bf16 %v531, %v531
  %s533 = scalar_lea.vmem %s4, 2
  %534 = vst [vmem:[%s533] sm:$0x1] %v532
  %s535 = scalar_lea.vmem %s0, 9
  %v536 = vld [vmem:[%s535] sm:$0x7]
  %v537 = vunpack.c.l.bf16 %v536
  %538 = vmatprep.subr.bf16.mxu0 %v171
  %539 = vmatpush1.bf16.msra.mxu0 %v170
  %540 = vmatprep.subr.bf16.mxu0 %v168
  %541 = vmatpush1.bf16.msra.mxu0 %v167
  %542 = vmatprep.subr.bf16.mxu0 %v165
  %543 = vmatpush1.bf16.msra.mxu0 %v164
  %544 = vmatprep.subr.bf16.mxu0 %v162
  %545 = vmatpush1.bf16.msra.mxu0 %v161
  %546 = vmatprep.subr.bf16.mxu0 %v159
  %547 = vmatpush1.bf16.msra.mxu0 %v158
  %548 = vmatprep.subr.bf16.mxu0 %v156
  %549 = vmatpush1.bf16.msra.mxu0 %v155
  %550 = vmatprep.subr.bf16.mxu0 %v153
  %551 = vmatpush1.bf16.msra.mxu0 %v152
  %552 = vmatprep.subr.bf16.mxu0 %v150
  %553 = vmatpush1.bf16.msra.mxu0 %v149
  %554 = vmatprep.subr.bf16.mxu0 0
  %555 = vmatpush2.bf16.msra.mxu0 0
  %556 = vmatprep.subr.bf16.mxu0 0
  %557 = vmatpush2.bf16.msra.mxu0 0
  %558 = vmatprep.subr.bf16.mxu0 0
  %559 = vmatpush2.bf16.msra.mxu0 0
  %560 = vmatprep.subr.bf16.mxu0 0
  %561 = vmatpush2.bf16.msra.mxu0 0
  %562 = vmatprep.subr.bf16.mxu0 0
  %563 = vmatpush2.bf16.msra.mxu0 0
  %564 = vmatprep.subr.bf16.mxu0 0
  %565 = vmatpush2.bf16.msra.mxu0 0
  %566 = vmatprep.subr.bf16.mxu0 0
  %567 = vmatpush2.bf16.msra.mxu0 0
  %568 = vmatprep.subr.bf16.mxu0 0
  %569 = vmatpush2.bf16.msra.mxu0 0
  %570 = vmatprep.mubr.bf16.mxu0 0
  %571 = vmatmul.mubr.bf16.gmra.mxu0 %v532
  %v572 = vpop.f32.mrf.mxu0
  %v573 = vadd.f32 0.0, %v572
  %v574 = vpop.f32.mrf.mxu0
  %v575 = vadd.f32 0.0, %v574
  %v576 = vpop.f32.mrf.mxu0
  %v577 = vpop.f32.mrf.mxu0
  %578 = vdwg.mxu0
  %579 = vmatprep.subr.bf16.mxu0 0
  %580 = vmatpush1.bf16.msra.mxu0 %v172
  %581 = vmatprep.subr.bf16.mxu0 0
  %582 = vmatpush1.bf16.msra.mxu0 %v169
  %583 = vmatprep.subr.bf16.mxu0 0
  %584 = vmatpush1.bf16.msra.mxu0 %v166
  %585 = vmatprep.subr.bf16.mxu0 0
  %586 = vmatpush1.bf16.msra.mxu0 %v163
  %587 = vmatprep.subr.bf16.mxu0 0
  %588 = vmatpush1.bf16.msra.mxu0 %v160
  %589 = vmatprep.subr.bf16.mxu0 0
  %590 = vmatpush1.bf16.msra.mxu0 %v157
  %591 = vmatprep.subr.bf16.mxu0 0
  %592 = vmatpush1.bf16.msra.mxu0 %v154
  %593 = vmatprep.subr.bf16.mxu0 0
  %594 = vmatpush1.bf16.msra.mxu0 %v151
  %595 = vmatprep.subr.bf16.mxu0 0
  %596 = vmatpush2.bf16.msra.mxu0 0
  %597 = vmatprep.subr.bf16.mxu0 0
  %598 = vmatpush2.bf16.msra.mxu0 0
  %599 = vmatprep.subr.bf16.mxu0 0
  %600 = vmatpush2.bf16.msra.mxu0 0
  %601 = vmatprep.subr.bf16.mxu0 0
  %602 = vmatpush2.bf16.msra.mxu0 0
  %603 = vmatprep.subr.bf16.mxu0 0
  %604 = vmatpush2.bf16.msra.mxu0 0
  %605 = vmatprep.subr.bf16.mxu0 0
  %606 = vmatpush2.bf16.msra.mxu0 0
  %607 = vmatprep.subr.bf16.mxu0 0
  %608 = vmatpush2.bf16.msra.mxu0 0
  %609 = vmatprep.subr.bf16.mxu0 0
  %610 = vmatpush2.bf16.msra.mxu0 0
  %611 = vmatprep.mubr.bf16.mxu0 0
  %612 = vmatmul.mubr.bf16.gmra.mxu0 %v532
  %v613 = vpop.f32.mrf.mxu0
  %v614 = vadd.f32 0.0, %v613
  %v615 = vpop.f32.mrf.mxu0
  %v616 = vpop.f32.mrf.mxu0
  %v617 = vpop.f32.mrf.mxu0
  %618 = vdwg.mxu0
  %v619 = vadd.f32 %v537, %v573
  %v620 = vxor.u32 %v619, 2147483648
  %v621 = vmul.f32 %v620, 1.442695
  %v622 = vpow.pop %v621
  %v623 = vadd.f32 %v622, 1.0
  %v624 = vrcp.pop %v623
  %v625 = vmul.f32 1.0, %v624
  %v627 = vrot.slane %v537, 2
  %v629 = vadd.f32 %v627, %v575
  %v630 = vxor.u32 %v629, 2147483648
  %v631 = vmul.f32 %v630, 1.442695
  %v632 = vpow.pop %v631
  %v633 = vadd.f32 %v632, 1.0
  %v634 = vrcp.pop %v633
  %v635 = vmul.f32 1.0, %v634
  %v636 = vadd.f32 %v614, %v63
  %v637 = vmul.f32 %v625, %v636
  %v638 = vrot.slane %v537, 4
  %v640 = vadd.f32 %v638, %v637
  %v641 = vtanh.pop %v640
  %v642 = vsub.f32 1.0, %v635
  %v643 = vmul.f32 %v642, %v641
  %v644 = vmul.f32 %v635, %v531
  %v645 = vadd.f32 %v643, %v644
  %v646 = vpack.c.bf16 %v645, %v645
  %s647 = scalar_lea.vmem %s4, 3
  %648 = vst [vmem:[%s647] sm:$0x1] %v646
  %s649 = scalar_lea.vmem %s0, 12
  %v650 = vld [vmem:[%s649] sm:$0x7]
  %v651 = vunpack.c.l.bf16 %v650
  %652 = vmatprep.subr.bf16.mxu0 %v171
  %653 = vmatpush1.bf16.msra.mxu0 %v170
  %654 = vmatprep.subr.bf16.mxu0 %v168
  %655 = vmatpush1.bf16.msra.mxu0 %v167
  %656 = vmatprep.subr.bf16.mxu0 %v165
  %657 = vmatpush1.bf16.msra.mxu0 %v164
  %658 = vmatprep.subr.bf16.mxu0 %v162
  %659 = vmatpush1.bf16.msra.mxu0 %v161
  %660 = vmatprep.subr.bf16.mxu0 %v159
  %661 = vmatpush1.bf16.msra.mxu0 %v158
  %662 = vmatprep.subr.bf16.mxu0 %v156
  %663 = vmatpush1.bf16.msra.mxu0 %v155
  %664 = vmatprep.subr.bf16.mxu0 %v153
  %665 = vmatpush1.bf16.msra.mxu0 %v152
  %666 = vmatprep.subr.bf16.mxu0 %v150
  %667 = vmatpush1.bf16.msra.mxu0 %v149
  %668 = vmatprep.subr.bf16.mxu0 0
  %669 = vmatpush2.bf16.msra.mxu0 0
  %670 = vmatprep.subr.bf16.mxu0 0
  %671 = vmatpush2.bf16.msra.mxu0 0
  %672 = vmatprep.subr.bf16.mxu0 0
  %673 = vmatpush2.bf16.msra.mxu0 0
  %674 = vmatprep.subr.bf16.mxu0 0
  %675 = vmatpush2.bf16.msra.mxu0 0
  %676 = vmatprep.subr.bf16.mxu0 0
  %677 = vmatpush2.bf16.msra.mxu0 0
  %678 = vmatprep.subr.bf16.mxu0 0
  %679 = vmatpush2.bf16.msra.mxu0 0
  %680 = vmatprep.subr.bf16.mxu0 0
  %681 = vmatpush2.bf16.msra.mxu0 0
  %682 = vmatprep.subr.bf16.mxu0 0
  %683 = vmatpush2.bf16.msra.mxu0 0
  %684 = vmatprep.mubr.bf16.mxu0 0
  %685 = vmatmul.mubr.bf16.gmra.mxu0 %v646
  %v686 = vpop.f32.mrf.mxu0
  %v687 = vadd.f32 0.0, %v686
  %v688 = vpop.f32.mrf.mxu0
  %v689 = vadd.f32 0.0, %v688
  %v690 = vpop.f32.mrf.mxu0
  %v691 = vpop.f32.mrf.mxu0
  %692 = vdwg.mxu0
  %693 = vmatprep.subr.bf16.mxu0 0
  %694 = vmatpush1.bf16.msra.mxu0 %v172
  %695 = vmatprep.subr.bf16.mxu0 0
  %696 = vmatpush1.bf16.msra.mxu0 %v169
  %697 = vmatprep.subr.bf16.mxu0 0
  %698 = vmatpush1.bf16.msra.mxu0 %v166
  %699 = vmatprep.subr.bf16.mxu0 0
  %700 = vmatpush1.bf16.msra.mxu0 %v163
  %701 = vmatprep.subr.bf16.mxu0 0
  %702 = vmatpush1.bf16.msra.mxu0 %v160
  %703 = vmatprep.subr.bf16.mxu0 0
  %704 = vmatpush1.bf16.msra.mxu0 %v157
  %705 = vmatprep.subr.bf16.mxu0 0
  %706 = vmatpush1.bf16.msra.mxu0 %v154
  %707 = vmatprep.subr.bf16.mxu0 0
  %708 = vmatpush1.bf16.msra.mxu0 %v151
  %709 = vmatprep.subr.bf16.mxu0 0
  %710 = vmatpush2.bf16.msra.mxu0 0
  %711 = vmatprep.subr.bf16.mxu0 0
  %712 = vmatpush2.bf16.msra.mxu0 0
  %713 = vmatprep.subr.bf16.mxu0 0
  %714 = vmatpush2.bf16.msra.mxu0 0
  %715 = vmatprep.subr.bf16.mxu0 0
  %716 = vmatpush2.bf16.msra.mxu0 0
  %717 = vmatprep.subr.bf16.mxu0 0
  %718 = vmatpush2.bf16.msra.mxu0 0
  %719 = vmatprep.subr.bf16.mxu0 0
  %720 = vmatpush2.bf16.msra.mxu0 0
  %721 = vmatprep.subr.bf16.mxu0 0
  %722 = vmatpush2.bf16.msra.mxu0 0
  %723 = vmatprep.subr.bf16.mxu0 0
  %724 = vmatpush2.bf16.msra.mxu0 0
  %725 = vmatprep.mubr.bf16.mxu0 0
  %726 = vmatmul.mubr.bf16.gmra.mxu0 %v646
  %v727 = vpop.f32.mrf.mxu0
  %v728 = vadd.f32 0.0, %v727
  %v729 = vpop.f32.mrf.mxu0
  %v730 = vpop.f32.mrf.mxu0
  %v731 = vpop.f32.mrf.mxu0
  %732 = vdwg.mxu0
  %v733 = vadd.f32 %v651, %v687
  %v734 = vxor.u32 %v733, 2147483648
  %v735 = vmul.f32 %v734, 1.442695
  %v736 = vpow.pop %v735
  %v737 = vadd.f32 %v736, 1.0
  %v738 = vrcp.pop %v737
  %v739 = vmul.f32 1.0, %v738
  %v741 = vrot.slane %v651, 2
  %v743 = vadd.f32 %v741, %v689
  %v744 = vxor.u32 %v743, 2147483648
  %v745 = vmul.f32 %v744, 1.442695
  %v746 = vpow.pop %v745
  %v747 = vadd.f32 %v746, 1.0
  %v748 = vrcp.pop %v747
  %v749 = vmul.f32 1.0, %v748
  %v750 = vadd.f32 %v728, %v63
  %v751 = vmul.f32 %v739, %v750
  %v752 = vrot.slane %v651, 4
  %v754 = vadd.f32 %v752, %v751
  %v755 = vtanh.pop %v754
  %v756 = vsub.f32 1.0, %v749
  %v757 = vmul.f32 %v756, %v755
  %v758 = vmul.f32 %v749, %v645
  %v759 = vadd.f32 %v757, %v758
  %v760 = vpack.c.bf16 %v759, %v759
  %s761 = scalar_lea.vmem %s4, 4
  %762 = vst [vmem:[%s761] sm:$0x1] %v760
  %s763 = scalar_lea.vmem %s0, 15
  %v764 = vld [vmem:[%s763] sm:$0x7]
  %v765 = vunpack.c.l.bf16 %v764
  %766 = vmatprep.subr.bf16.mxu0 %v171
  %767 = vmatpush1.bf16.msra.mxu0 %v170
  %768 = vmatprep.subr.bf16.mxu0 %v168
  %769 = vmatpush1.bf16.msra.mxu0 %v167
  %770 = vmatprep.subr.bf16.mxu0 %v165
  %771 = vmatpush1.bf16.msra.mxu0 %v164
  %772 = vmatprep.subr.bf16.mxu0 %v162
  %773 = vmatpush1.bf16.msra.mxu0 %v161
  %774 = vmatprep.subr.bf16.mxu0 %v159
  %775 = vmatpush1.bf16.msra.mxu0 %v158
  %776 = vmatprep.subr.bf16.mxu0 %v156
  %777 = vmatpush1.bf16.msra.mxu0 %v155
  %778 = vmatprep.subr.bf16.mxu0 %v153
  %779 = vmatpush1.bf16.msra.mxu0 %v152
  %780 = vmatprep.subr.bf16.mxu0 %v150
  %781 = vmatpush1.bf16.msra.mxu0 %v149
  %782 = vmatprep.subr.bf16.mxu0 0
  %783 = vmatpush2.bf16.msra.mxu0 0
  %784 = vmatprep.subr.bf16.mxu0 0
  %785 = vmatpush2.bf16.msra.mxu0 0
  %786 = vmatprep.subr.bf16.mxu0 0
  %787 = vmatpush2.bf16.msra.mxu0 0
  %788 = vmatprep.subr.bf16.mxu0 0
  %789 = vmatpush2.bf16.msra.mxu0 0
  %790 = vmatprep.subr.bf16.mxu0 0
  %791 = vmatpush2.bf16.msra.mxu0 0
  %792 = vmatprep.subr.bf16.mxu0 0
  %793 = vmatpush2.bf16.msra.mxu0 0
  %794 = vmatprep.subr.bf16.mxu0 0
  %795 = vmatpush2.bf16.msra.mxu0 0
  %796 = vmatprep.subr.bf16.mxu0 0
  %797 = vmatpush2.bf16.msra.mxu0 0
  %798 = vmatprep.mubr.bf16.mxu0 0
  %799 = vmatmul.mubr.bf16.gmra.mxu0 %v760
  %v800 = vpop.f32.mrf.mxu0
  %v801 = vadd.f32 0.0, %v800
  %v802 = vpop.f32.mrf.mxu0
  %v803 = vadd.f32 0.0, %v802
  %v804 = vpop.f32.mrf.mxu0
  %v805 = vpop.f32.mrf.mxu0
  %806 = vdwg.mxu0
  %807 = vmatprep.subr.bf16.mxu0 0
  %808 = vmatpush1.bf16.msra.mxu0 %v172
  %809 = vmatprep.subr.bf16.mxu0 0
  %810 = vmatpush1.bf16.msra.mxu0 %v169
  %811 = vmatprep.subr.bf16.mxu0 0
  %812 = vmatpush1.bf16.msra.mxu0 %v166
  %813 = vmatprep.subr.bf16.mxu0 0
  %814 = vmatpush1.bf16.msra.mxu0 %v163
  %815 = vmatprep.subr.bf16.mxu0 0
  %816 = vmatpush1.bf16.msra.mxu0 %v160
  %817 = vmatprep.subr.bf16.mxu0 0
  %818 = vmatpush1.bf16.msra.mxu0 %v157
  %819 = vmatprep.subr.bf16.mxu0 0
  %820 = vmatpush1.bf16.msra.mxu0 %v154
  %821 = vmatprep.subr.bf16.mxu0 0
  %822 = vmatpush1.bf16.msra.mxu0 %v151
  %823 = vmatprep.subr.bf16.mxu0 0
  %824 = vmatpush2.bf16.msra.mxu0 0
  %825 = vmatprep.subr.bf16.mxu0 0
  %826 = vmatpush2.bf16.msra.mxu0 0
  %827 = vmatprep.subr.bf16.mxu0 0
  %828 = vmatpush2.bf16.msra.mxu0 0
  %829 = vmatprep.subr.bf16.mxu0 0
  %830 = vmatpush2.bf16.msra.mxu0 0
  %831 = vmatprep.subr.bf16.mxu0 0
  %832 = vmatpush2.bf16.msra.mxu0 0
  %833 = vmatprep.subr.bf16.mxu0 0
  %834 = vmatpush2.bf16.msra.mxu0 0
  %835 = vmatprep.subr.bf16.mxu0 0
  %836 = vmatpush2.bf16.msra.mxu0 0
  %837 = vmatprep.subr.bf16.mxu0 0
  %838 = vmatpush2.bf16.msra.mxu0 0
  %839 = vmatprep.mubr.bf16.mxu0 0
  %840 = vmatmul.mubr.bf16.gmra.mxu0 %v760
  %v841 = vpop.f32.mrf.mxu0
  %v842 = vadd.f32 0.0, %v841
  %v843 = vpop.f32.mrf.mxu0
  %v844 = vpop.f32.mrf.mxu0
  %v845 = vpop.f32.mrf.mxu0
  %846 = vdwg.mxu0
  %v847 = vadd.f32 %v765, %v801
  %v848 = vxor.u32 %v847, 2147483648
  %v849 = vmul.f32 %v848, 1.442695
  %v850 = vpow.pop %v849
  %v851 = vadd.f32 %v850, 1.0
  %v852 = vrcp.pop %v851
  %v853 = vmul.f32 1.0, %v852
  %v855 = vrot.slane %v765, 2
  %v857 = vadd.f32 %v855, %v803
  %v858 = vxor.u32 %v857, 2147483648
  %v859 = vmul.f32 %v858, 1.442695
  %v860 = vpow.pop %v859
  %v861 = vadd.f32 %v860, 1.0
  %v862 = vrcp.pop %v861
  %v863 = vmul.f32 1.0, %v862
  %v864 = vadd.f32 %v842, %v63
  %v865 = vmul.f32 %v853, %v864
  %v866 = vrot.slane %v765, 4
  %v868 = vadd.f32 %v866, %v865
  %v869 = vtanh.pop %v868
  %v870 = vsub.f32 1.0, %v863
  %v871 = vmul.f32 %v870, %v869
  %v872 = vmul.f32 %v863, %v759
  %v873 = vadd.f32 %v871, %v872
  %v874 = vpack.c.bf16 %v873, %v873
  %s875 = scalar_lea.vmem %s4, 5
  %876 = vst [vmem:[%s875] sm:$0x1] %v874
  %s877 = scalar_lea.vmem %s0, 18
  %v878 = vld [vmem:[%s877] sm:$0x7]
  %v879 = vunpack.c.l.bf16 %v878
  %880 = vmatprep.subr.bf16.mxu0 %v171
  %881 = vmatpush1.bf16.msra.mxu0 %v170
  %882 = vmatprep.subr.bf16.mxu0 %v168
  %883 = vmatpush1.bf16.msra.mxu0 %v167
  %884 = vmatprep.subr.bf16.mxu0 %v165
  %885 = vmatpush1.bf16.msra.mxu0 %v164
  %886 = vmatprep.subr.bf16.mxu0 %v162
  %887 = vmatpush1.bf16.msra.mxu0 %v161
  %888 = vmatprep.subr.bf16.mxu0 %v159
  %889 = vmatpush1.bf16.msra.mxu0 %v158
  %890 = vmatprep.subr.bf16.mxu0 %v156
  %891 = vmatpush1.bf16.msra.mxu0 %v155
  %892 = vmatprep.subr.bf16.mxu0 %v153
  %893 = vmatpush1.bf16.msra.mxu0 %v152
  %894 = vmatprep.subr.bf16.mxu0 %v150
  %895 = vmatpush1.bf16.msra.mxu0 %v149
  %896 = vmatprep.subr.bf16.mxu0 0
  %897 = vmatpush2.bf16.msra.mxu0 0
  %898 = vmatprep.subr.bf16.mxu0 0
  %899 = vmatpush2.bf16.msra.mxu0 0
  %900 = vmatprep.subr.bf16.mxu0 0
  %901 = vmatpush2.bf16.msra.mxu0 0
  %902 = vmatprep.subr.bf16.mxu0 0
  %903 = vmatpush2.bf16.msra.mxu0 0
  %904 = vmatprep.subr.bf16.mxu0 0
  %905 = vmatpush2.bf16.msra.mxu0 0
  %906 = vmatprep.subr.bf16.mxu0 0
  %907 = vmatpush2.bf16.msra.mxu0 0
  %908 = vmatprep.subr.bf16.mxu0 0
  %909 = vmatpush2.bf16.msra.mxu0 0
  %910 = vmatprep.subr.bf16.mxu0 0
  %911 = vmatpush2.bf16.msra.mxu0 0
  %912 = vmatprep.mubr.bf16.mxu0 0
  %913 = vmatmul.mubr.bf16.gmra.mxu0 %v874
  %v914 = vpop.f32.mrf.mxu0
  %v915 = vadd.f32 0.0, %v914
  %v916 = vpop.f32.mrf.mxu0
  %v917 = vadd.f32 0.0, %v916
  %v918 = vpop.f32.mrf.mxu0
  %v919 = vpop.f32.mrf.mxu0
  %920 = vdwg.mxu0
  %921 = vmatprep.subr.bf16.mxu0 0
  %922 = vmatpush1.bf16.msra.mxu0 %v172
  %923 = vmatprep.subr.bf16.mxu0 0
  %924 = vmatpush1.bf16.msra.mxu0 %v169
  %925 = vmatprep.subr.bf16.mxu0 0
  %926 = vmatpush1.bf16.msra.mxu0 %v166
  %927 = vmatprep.subr.bf16.mxu0 0
  %928 = vmatpush1.bf16.msra.mxu0 %v163
  %929 = vmatprep.subr.bf16.mxu0 0
  %930 = vmatpush1.bf16.msra.mxu0 %v160
  %931 = vmatprep.subr.bf16.mxu0 0
  %932 = vmatpush1.bf16.msra.mxu0 %v157
  %933 = vmatprep.subr.bf16.mxu0 0
  %934 = vmatpush1.bf16.msra.mxu0 %v154
  %935 = vmatprep.subr.bf16.mxu0 0
  %936 = vmatpush1.bf16.msra.mxu0 %v151
  %937 = vmatprep.subr.bf16.mxu0 0
  %938 = vmatpush2.bf16.msra.mxu0 0
  %939 = vmatprep.subr.bf16.mxu0 0
  %940 = vmatpush2.bf16.msra.mxu0 0
  %941 = vmatprep.subr.bf16.mxu0 0
  %942 = vmatpush2.bf16.msra.mxu0 0
  %943 = vmatprep.subr.bf16.mxu0 0
  %944 = vmatpush2.bf16.msra.mxu0 0
  %945 = vmatprep.subr.bf16.mxu0 0
  %946 = vmatpush2.bf16.msra.mxu0 0
  %947 = vmatprep.subr.bf16.mxu0 0
  %948 = vmatpush2.bf16.msra.mxu0 0
  %949 = vmatprep.subr.bf16.mxu0 0
  %950 = vmatpush2.bf16.msra.mxu0 0
  %951 = vmatprep.subr.bf16.mxu0 0
  %952 = vmatpush2.bf16.msra.mxu0 0
  %953 = vmatprep.mubr.bf16.mxu0 0
  %954 = vmatmul.mubr.bf16.gmra.mxu0 %v874
  %v955 = vpop.f32.mrf.mxu0
  %v956 = vadd.f32 0.0, %v955
  %v957 = vpop.f32.mrf.mxu0
  %v958 = vpop.f32.mrf.mxu0
  %v959 = vpop.f32.mrf.mxu0
  %960 = vdwg.mxu0
  %v961 = vadd.f32 %v879, %v915
  %v962 = vxor.u32 %v961, 2147483648
  %v963 = vmul.f32 %v962, 1.442695
  %v964 = vpow.pop %v963
  %v965 = vadd.f32 %v964, 1.0
  %v966 = vrcp.pop %v965
  %v967 = vmul.f32 1.0, %v966
  %v969 = vrot.slane %v879, 2
  %v971 = vadd.f32 %v969, %v917
  %v972 = vxor.u32 %v971, 2147483648
  %v973 = vmul.f32 %v972, 1.442695
  %v974 = vpow.pop %v973
  %v975 = vadd.f32 %v974, 1.0
  %v976 = vrcp.pop %v975
  %v977 = vmul.f32 1.0, %v976
  %v978 = vadd.f32 %v956, %v63
  %v979 = vmul.f32 %v967, %v978
  %v980 = vrot.slane %v879, 4
  %v982 = vadd.f32 %v980, %v979
  %v983 = vtanh.pop %v982
  %v984 = vsub.f32 1.0, %v977
  %v985 = vmul.f32 %v984, %v983
  %v986 = vmul.f32 %v977, %v873
  %v987 = vadd.f32 %v985, %v986
  %v988 = vpack.c.bf16 %v987, %v987
  %s989 = scalar_lea.vmem %s4, 6
  %990 = vst [vmem:[%s989] sm:$0x1] %v988
  %s991 = scalar_lea.vmem %s0, 21
  %v992 = vld [vmem:[%s991] sm:$0x7]
  %v993 = vunpack.c.l.bf16 %v992
  %994 = vmatprep.subr.bf16.mxu0 %v171
  %995 = vmatpush1.bf16.msra.mxu0 %v170
  %996 = vmatprep.subr.bf16.mxu0 %v168
  %997 = vmatpush1.bf16.msra.mxu0 %v167
  %998 = vmatprep.subr.bf16.mxu0 %v165
  %999 = vmatpush1.bf16.msra.mxu0 %v164
  %1000 = vmatprep.subr.bf16.mxu0 %v162
  %1001 = vmatpush1.bf16.msra.mxu0 %v161
  %1002 = vmatprep.subr.bf16.mxu0 %v159
  %1003 = vmatpush1.bf16.msra.mxu0 %v158
  %1004 = vmatprep.subr.bf16.mxu0 %v156
  %1005 = vmatpush1.bf16.msra.mxu0 %v155
  %1006 = vmatprep.subr.bf16.mxu0 %v153
  %1007 = vmatpush1.bf16.msra.mxu0 %v152
  %1008 = vmatprep.subr.bf16.mxu0 %v150
  %1009 = vmatpush1.bf16.msra.mxu0 %v149
  %1010 = vmatprep.subr.bf16.mxu0 0
  %1011 = vmatpush2.bf16.msra.mxu0 0
  %1012 = vmatprep.subr.bf16.mxu0 0
  %1013 = vmatpush2.bf16.msra.mxu0 0
  %1014 = vmatprep.subr.bf16.mxu0 0
  %1015 = vmatpush2.bf16.msra.mxu0 0
  %1016 = vmatprep.subr.bf16.mxu0 0
  %1017 = vmatpush2.bf16.msra.mxu0 0
  %1018 = vmatprep.subr.bf16.mxu0 0
  %1019 = vmatpush2.bf16.msra.mxu0 0
  %1020 = vmatprep.subr.bf16.mxu0 0
  %1021 = vmatpush2.bf16.msra.mxu0 0
  %1022 = vmatprep.subr.bf16.mxu0 0
  %1023 = vmatpush2.bf16.msra.mxu0 0
  %1024 = vmatprep.subr.bf16.mxu0 0
  %1025 = vmatpush2.bf16.msra.mxu0 0
  %1026 = vmatprep.mubr.bf16.mxu0 0
  %1027 = vmatmul.mubr.bf16.gmra.mxu0 %v988
  %v1028 = vpop.f32.mrf.mxu0
  %v1029 = vadd.f32 0.0, %v1028
  %v1030 = vpop.f32.mrf.mxu0
  %v1031 = vadd.f32 0.0, %v1030
  %v1032 = vpop.f32.mrf.mxu0
  %v1033 = vpop.f32.mrf.mxu0
  %1034 = vdwg.mxu0
  %1035 = vmatprep.subr.bf16.mxu0 0
  %1036 = vmatpush1.bf16.msra.mxu0 %v172
  %1037 = vmatprep.subr.bf16.mxu0 0
  %1038 = vmatpush1.bf16.msra.mxu0 %v169
  %1039 = vmatprep.subr.bf16.mxu0 0
  %1040 = vmatpush1.bf16.msra.mxu0 %v166
  %1041 = vmatprep.subr.bf16.mxu0 0
  %1042 = vmatpush1.bf16.msra.mxu0 %v163
  %1043 = vmatprep.subr.bf16.mxu0 0
  %1044 = vmatpush1.bf16.msra.mxu0 %v160
  %1045 = vmatprep.subr.bf16.mxu0 0
  %1046 = vmatpush1.bf16.msra.mxu0 %v157
  %1047 = vmatprep.subr.bf16.mxu0 0
  %1048 = vmatpush1.bf16.msra.mxu0 %v154
  %1049 = vmatprep.subr.bf16.mxu0 0
  %1050 = vmatpush1.bf16.msra.mxu0 %v151
  %1051 = vmatprep.subr.bf16.mxu0 0
  %1052 = vmatpush2.bf16.msra.mxu0 0
  %1053 = vmatprep.subr.bf16.mxu0 0
  %1054 = vmatpush2.bf16.msra.mxu0 0
  %1055 = vmatprep.subr.bf16.mxu0 0
  %1056 = vmatpush2.bf16.msra.mxu0 0
  %1057 = vmatprep.subr.bf16.mxu0 0
  %1058 = vmatpush2.bf16.msra.mxu0 0
  %1059 = vmatprep.subr.bf16.mxu0 0
  %1060 = vmatpush2.bf16.msra.mxu0 0
  %1061 = vmatprep.subr.bf16.mxu0 0
  %1062 = vmatpush2.bf16.msra.mxu0 0
  %1063 = vmatprep.subr.bf16.mxu0 0
  %1064 = vmatpush2.bf16.msra.mxu0 0
  %1065 = vmatprep.subr.bf16.mxu0 0
  %1066 = vmatpush2.bf16.msra.mxu0 0
  %1067 = vmatprep.mubr.bf16.mxu0 0
  %1068 = vmatmul.mubr.bf16.gmra.mxu0 %v988
  %v1069 = vpop.f32.mrf.mxu0
  %v1070 = vadd.f32 0.0, %v1069
  %v1071 = vpop.f32.mrf.mxu0
  %v1072 = vpop.f32.mrf.mxu0
  %v1073 = vpop.f32.mrf.mxu0
  %1074 = vdwg.mxu0
  %v1075 = vadd.f32 %v993, %v1029
  %v1076 = vxor.u32 %v1075, 2147483648
  %v1077 = vmul.f32 %v1076, 1.442695
  %v1078 = vpow.pop %v1077
  %v1079 = vadd.f32 %v1078, 1.0
  %v1080 = vrcp.pop %v1079
  %v1081 = vmul.f32 1.0, %v1080
  %v1083 = vrot.slane %v993, 2
  %v1085 = vadd.f32 %v1083, %v1031
  %v1086 = vxor.u32 %v1085, 2147483648
  %v1087 = vmul.f32 %v1086, 1.442695
  %v1088 = vpow.pop %v1087
  %v1089 = vadd.f32 %v1088, 1.0
  %v1090 = vrcp.pop %v1089
  %v1091 = vmul.f32 1.0, %v1090
  %v1092 = vadd.f32 %v1070, %v63
  %v1093 = vmul.f32 %v1081, %v1092
  %v1094 = vrot.slane %v993, 4
  %v1096 = vadd.f32 %v1094, %v1093
  %v1097 = vtanh.pop %v1096
  %v1098 = vsub.f32 1.0, %v1091
  %v1099 = vmul.f32 %v1098, %v1097
  %v1100 = vmul.f32 %v1091, %v987
  %v1101 = vadd.f32 %v1099, %v1100
  %v1102 = vpack.c.bf16 %v1101, %v1101
  %s1103 = scalar_lea.vmem %s4, 7
  %1104 = vst [vmem:[%s1103] sm:$0x1] %v1102
  %1105 = vst [vmem:[#allocation2] sm:$0x3] %v1101
  // Predicated region
  $region22: #{creation_rnn_forward.6} parent=0 // pred_check
    %p1106 = pneg %p20
  $region23: #{creation_rnn_forward.6} parent=0 // pred_check_branch
    %1108 = sbr.rel (%p1106) target = $region25
  $region24: #{creation_rnn_forward.6} parent=0 // pred_region
    %1109 = vst [vmem:[%s5] sm:$0x3] %v1101
  $region25: #{creation_rnn_forward.6} parent=0 // pred_fallthru
    _
  // Predicated region
  $region26: #{creation_rnn_forward.6} parent=0 // pred_check
    _
  $region27: #{creation_rnn_forward.6} parent=0 // pred_check_branch
    %1111 = sbr.rel (0) target = $region29
  $region28: #{creation_rnn_forward.6} parent=0 // pred_region
    _
  $region29: #{creation_rnn_forward.6} parent=0 // pred_fallthru
    _
  // Predicated region
  $region30: #{creation_rnn_forward.6} parent=0 // pred_check
    _
  $region31: #{creation_rnn_forward.6} parent=0 // pred_check_branch
    %1113 = sbr.rel (0) target = $region33
  $region32: #{creation_rnn_forward.6} parent=0 // pred_region
    _
  $region33: #{creation_rnn_forward.6} parent=0 // pred_fallthru
    _
  // Predicated region
  $region34: #{creation_rnn_forward.6} parent=0 // pred_check
    _
  $region35: #{creation_rnn_forward.6} parent=0 // pred_check_branch
    %1115 = sbr.rel (0) target = $region37
  $region36: #{creation_rnn_forward.6} parent=0 // pred_region
    _
  $region37: #{creation_rnn_forward.6} parent=0 // pred_fallthru
    _
  // Predicated region
  $region38: #{creation_rnn_forward.6} parent=0 // pred_check
    _
  $region39: #{creation_rnn_forward.6} parent=0 // pred_check_branch
    %1117 = sbr.rel (0) target = $region41
  $region40: #{creation_rnn_forward.6} parent=0 // pred_region
    _
  $region41: #{creation_rnn_forward.6} parent=0 // pred_fallthru
    _

</llo_original>
